<compile_context>
chip_gen: v5e
topology: v5e:2x2
jax: 0.10.0
libtpu: 0.0.40
codegen_flags: <defaults>
</compile_context>

<pallas_src>
import numpy as np
import jax
import jax.numpy as jnp
from jax.experimental import pallas as pl
from jax.experimental.pallas import tpu as pltpu

DATA_DIM = 2
Z_DIM = 2
HIDDEN = 128
NUM_RES_BLOCKS = 3
N_MXU = 3 * NUM_RES_BLOCKS + 3          # 12 [128,128] MXU linears
INV_SQRT2 = float(1.0 / np.sqrt(2.0))


def _silu(v):
    return v * jax.nn.sigmoid(v)


# ----------------------------------------------------------------------------
# Kernel
# ----------------------------------------------------------------------------
def _toy_generator_kernel(x_ref, z_ref,
                          wz0_ref, bz0_ref,         # z_module.0   (Z_DIM,H) f32  -> VPU
                          wmap_ref, bmap_ref,       # x_module.map (DATA_DIM,H) f32 -> VPU
                          wmxu_ref, bmxu_ref,       # (12,H,H) bf16 / (12,1,H) f32 -> MXU
                          out_ref):
    def mxu_lin(h, i):
        # bf16 operands on the MXU, f32 accumulate, f32 bias add on the VPU.
        return (jnp.dot(h.astype(jnp.bfloat16), wmxu_ref[i],
                        preferred_element_type=jnp.float32)
                + bmxu_ref[i])

    def vpu_lin_k2(h2, w_ref, b_ref):
        # K=2 linear as a VPU outer product: frees a full MXU pass per call.
        w = w_ref[...]
        return h2[:, 0:1] * w[0:1, :] + h2[:, 1:2] * w[1:2, :] + b_ref[...]

    x = x_ref[...].astype(jnp.float32)
    z = z_ref[...].astype(jnp.float32)

    # ---- z_module: Linear -> SiLU -> Linear ----
    zz = _silu(vpu_lin_k2(z, wz0_ref, bz0_ref))
    zz = mxu_lin(zz, 0)

    # ---- x_module: ResNet_FC ----
    h = vpu_lin_k2(x, wmap_ref, bmap_ref)          # self.map
    li = 1
    for _ in range(NUM_RES_BLOCKS):
        t = h
        for _ in range(3):                          # (Linear -> SiLU) x 3
            t = _silu(mxu_lin(t, li))
            li += 1
        h = (h + t) * jnp.float32(INV_SQRT2)

    # ---- out_module: Linear -> SiLU -> Linear (padded to H columns) ----
    o = _silu(mxu_lin(h + zz, li))
    li += 1
    o = mxu_lin(o, li)                              # [M,H]; cols >= DATA_DIM are zero weights

    out_ref[...] = o.astype(out_ref.dtype)


# ----------------------------------------------------------------------------
# Parameters
# ----------------------------------------------------------------------------
def make_params(key, zero_out_last_layer=False):
    """Deterministic PyTorch-style (Kaiming-uniform-ish) init.
    Module order: z0, z2, map, 9 res-block linears, out0, out2.
    Weights stored [in, out] f32; biases [1, out] f32."""
    params = []

    def linear(key, fan_in, fan_out):
        k1, k2 = jax.random.split(key)
        bound = 1.0 / np.sqrt(fan_in)
        w = jax.random.uniform(k1, (fan_in, fan_out), jnp.float32, -bound, bound)
        b = jax.random.uniform(k2, (1, fan_out), jnp.float32, -bound, bound)
        return w, b

    keys = jax.random.split(key, 16)
    ki = iter(keys)

    params += list(linear(next(ki), Z_DIM, HIDDEN))          # z_module.0
    params += list(linear(next(ki), HIDDEN, HIDDEN))         # z_module.2
    params += list(linear(next(ki), DATA_DIM, HIDDEN))       # x_module.map
    for _ in range(NUM_RES_BLOCKS):
        for _ in range(3):
            params += list(linear(next(ki), HIDDEN, HIDDEN))  # res blocks
    params += list(linear(next(ki), HIDDEN, HIDDEN))         # out_module.0
    w_last, b_last = linear(next(ki), HIDDEN, DATA_DIM)      # out_module.2
    if zero_out_last_layer:
        w_last = jnp.zeros_like(w_last)
        b_last = jnp.zeros_like(b_last)
    params += [w_last, b_last]
    return params


def pack_kernel_params(params):
    """Pack for the kernel:
      - K=2 layers stay f32 [2,H] / [1,H]
      - 12 MXU weights -> one bf16 stack (12,H,H); biases -> f32 stack (12,1,H)
      - last [H,DATA_DIM] projection zero-padded to [H,H] (lane-dense output)."""
    ws = params[0::2]
    bs = params[1::2]

    wz0, bz0 = ws[0], bs[0]                 # z_module.0
    wmap, bmap = ws[2], bs[2]               # x_module.map

    mxu_w = [ws[1]] + list(ws[3:12]) + [ws[12]]   # z2, 9 res linears, out0
    mxu_b = [bs[1]] + list(bs[3:12]) + [bs[12]]

    w_last = jnp.zeros((HIDDEN, HIDDEN), jnp.float32).at[:, :DATA_DIM].set(ws[13])
    b_last = jnp.zeros((1, HIDDEN), jnp.float32).at[:, :DATA_DIM].set(bs[13])
    mxu_w.append(w_last)
    mxu_b.append(b_last)

    wmxu = jnp.stack([w.astype(jnp.bfloat16) for w in mxu_w])   # (12,H,H) bf16
    bmxu = jnp.stack(mxu_b)                                      # (12,1,H) f32
    return wz0, bz0, wmap, bmap, wmxu, bmxu


# ----------------------------------------------------------------------------
# Wrapper
# ----------------------------------------------------------------------------
def _pick_batch_tile(B):
    """MXU-friendly rows per grid step; keep >=2 grid steps when possible (megacore)."""
    if B >= 2048:
        return 1024
    if B >= 1024:
        return 512
    if B >= 512:
        return 256
    if B >= 16:
        return max(8, ((B // 2) // 8) * 8)    # 2+ steps, sublane aligned
    return max(8, -(-B // 8) * 8)             # tiny batch: one padded tile


def toy_generator_forward(x, z, params, *, batch_tile=None):
    B = x.shape[0]
    wz0, bz0, wmap, bmap, wmxu, bmxu = pack_kernel_params(params)

    if batch_tile is None:
        batch_tile = _pick_batch_tile(B)
    grid_b = -(-B // batch_tile)              # ceil-div
    padded_B = grid_b * batch_tile
    if padded_B != B:
        pad = padded_B - B
        x = jnp.pad(x, ((0, pad), (0, 0)))
        z = jnp.pad(z, ((0, pad), (0, 0)))

    # Weights/biases: constant index_map -> DMA'd once, VMEM-resident across steps.
    in_specs = [
        pl.BlockSpec((batch_tile, DATA_DIM), lambda i: (i, 0)),
        pl.BlockSpec((batch_tile, Z_DIM), lambda i: (i, 0)),
        pl.BlockSpec((Z_DIM, HIDDEN), lambda i: (0, 0)),
        pl.BlockSpec((1, HIDDEN), lambda i: (0, 0)),
        pl.BlockSpec((DATA_DIM, HIDDEN), lambda i: (0, 0)),
        pl.BlockSpec((1, HIDDEN), lambda i: (0, 0)),
        pl.BlockSpec((N_MXU, HIDDEN, HIDDEN), lambda i: (0, 0, 0)),
        pl.BlockSpec((N_MXU, 1, HIDDEN), lambda i: (0, 0, 0)),
    ]
    out_spec = pl.BlockSpec((batch_tile, HIDDEN), lambda i: (i, 0))  # lane-dense output

    # Advisory cost estimate for XLA's scheduler.
    flops = 2 * padded_B * HIDDEN * HIDDEN * N_MXU + 4 * padded_B * 2 * HIDDEN
    transcendentals = (3 * NUM_RES_BLOCKS + 2) * padded_B * HIDDEN   # sigmoids in SiLU
    bytes_accessed = int(
        wmxu.size * 2 + bmxu.size * 4
        + (wz0.size + bz0.size + wmap.size + bmap.size) * 4
        + padded_B * (DATA_DIM + Z_DIM) * 4
        + padded_B * HIDDEN * 4
    )

    out = pl.pallas_call(
        _toy_generator_kernel,
        out_shape=jax.ShapeDtypeStruct((padded_B, HIDDEN), jnp.float32),
        grid_spec=pltpu.PrefetchScalarGridSpec(
            num_scalar_prefetch=0,
            grid=(grid_b,),
            in_specs=in_specs,
            out_specs=out_spec,
        ),
        compiler_params=pltpu.CompilerParams(
            dimension_semantics=("parallel",),     # shard batch tiles across TCs
            vmem_limit_bytes=32 * 1024 * 1024,     # footprint ~1-2 MiB even at tile 1024
        ),
        cost_estimate=pl.CostEstimate(
            flops=flops,
            transcendentals=transcendentals,
            bytes_accessed=bytes_accessed,
        ),
    )(x, z, wz0, bz0, wmap, bmap, wmxu, bmxu)

    return out[:B, :DATA_DIM]


# ----------------------------------------------------------------------------
# References
# ----------------------------------------------------------------------------
def toy_generator_reference(x, z, params):
    """Pure-JAX f32 reference, structured exactly like the PyTorch module."""
    def lin(h, w, b):
        return h @ w + b

    zz = _silu(lin(z, params[0], params[1]))
    zz = lin(zz, params[2], params[3])
    h = lin(x, params[4], params[5])
    idx = 6
    for _ in range(NUM_RES_BLOCKS):
        t = h
        for _ in range(3):
            t = _silu(lin(t, params[idx], params[idx + 1]))
            idx += 2
        h = (h + t) / np.sqrt(2)
    o = h + zz
    o = _silu(lin(o, params[idx], params[idx + 1]))
    o = lin(o, params[idx + 2], params[idx + 3])
    return o


def toy_generator_reference_matched(x, z, params):
    """Pure-JAX reference with the SAME bf16-operand / f32-accumulate precision as the kernel."""
    ws = params[0::2]
    bs = params[1::2]

    def mxu(h, i):
        return jnp.dot(h.astype(jnp.bfloat16), ws[i].astype(jnp.bfloat16),
                       preferred_element_type=jnp.float32) + bs[i]

    def k2(h2, i):
        w = ws[i]
        return h2[:, 0:1] * w[0:1, :] + h2[:, 1:2] * w[1:2, :] + bs[i]

    zz = _silu(k2(z, 0))
    zz = mxu(zz, 1)
    h = k2(x, 2)
    li = 3
    for _ in range(NUM_RES_BLOCKS):
        t = h
        for _ in range(3):
            t = _silu(mxu(t, li))
            li += 1
        h = (h + t) * jnp.float32(INV_SQRT2)
    o = _silu(mxu(h + zz, li))
    li += 1
    o = mxu(o, li)
    return o


# ----------------------------------------------------------------------------
# Smoke test
# ----------------------------------------------------------------------------
if __name__ == "__main__":
    key = jax.random.PRNGKey(0)
    k_params, k_x, k_z, k_x2, k_z2 = jax.random.split(key, 5)

    params = make_params(k_params, zero_out_last_layer=False)

    # Small batch (single grid step).
    B = 8
    x = jax.random.normal(k_x, (B, DATA_DIM), jnp.float32)
    z = jax.random.normal(k_z, (B, Z_DIM), jnp.float32)

    out = jax.block_until_ready(toy_generator_forward(x, z, params))
    ref_matched = toy_generator_reference_matched(x, z, params)
    np.testing.assert_allclose(np.asarray(out), np.asarray(ref_matched),
                               rtol=1e-2, atol=1e-2)
    # Loose check vs the f32 PyTorch-faithful reference (bf16 matmul operands drift a little).
    ref_f32 = toy_generator_reference(x, z, params)
    np.testing.assert_allclose(np.asarray(out), np.asarray(ref_f32),
                               rtol=1e-1, atol=1e-1)

    # Non-multiple batch: exercises zero-padding + multi-step "parallel" grid.
    B2 = 200
    x2 = jax.random.normal(k_x2, (B2, DATA_DIM), jnp.float32)
    z2 = jax.random.normal(k_z2, (B2, Z_DIM), jnp.float32)
    out2 = jax.block_until_ready(toy_generator_forward(x2, z2, params))
    ref2 = toy_generator_reference_matched(x2, z2, params)
    np.testing.assert_allclose(np.asarray(out2), np.asarray(ref2),
                               rtol=1e-2, atol=1e-2)

    print("KERNEL_OK")
</pallas_src>

<mosaic_0001>
module attributes {stable_mosaic.version = 11 : i64} {
  func.func @_toy_generator_kernel(%arg0: i32, %arg1: memref<8x2xf32, #tpu.memory_space<vmem>>, %arg2: memref<8x2xf32, #tpu.memory_space<vmem>>, %arg3: memref<2x128xf32, #tpu.memory_space<vmem>>, %arg4: memref<1x128xf32, #tpu.memory_space<vmem>>, %arg5: memref<2x128xf32, #tpu.memory_space<vmem>>, %arg6: memref<1x128xf32, #tpu.memory_space<vmem>>, %arg7: memref<12x128x128xbf16, #tpu.memory_space<vmem>>, %arg8: memref<12x1x128xf32, #tpu.memory_space<vmem>>, %arg9: memref<8x128xf32, #tpu.memory_space<vmem>>) attributes {dimension_semantics = [#tpu.dimension_semantics<parallel>], iteration_bounds = array<i64: 1>, scalar_prefetch = 0 : i64, scratch_operands = 0 : i64, tpu.core_type = #tpu.core_type<tc>, window_params = [{transform_indices = @transform_0, window_bounds = array<i64: 8, 2>}, {transform_indices = @transform_1, window_bounds = array<i64: 8, 2>}, {pipeline_mode = #tpu.pipeline_mode<synchronous>, transform_indices = @transform_2, window_bounds = array<i64: 2, 128>}, {pipeline_mode = #tpu.pipeline_mode<synchronous>, transform_indices = @transform_3, window_bounds = array<i64: 1, 128>}, {pipeline_mode = #tpu.pipeline_mode<synchronous>, transform_indices = @transform_4, window_bounds = array<i64: 2, 128>}, {pipeline_mode = #tpu.pipeline_mode<synchronous>, transform_indices = @transform_5, window_bounds = array<i64: 1, 128>}, {pipeline_mode = #tpu.pipeline_mode<synchronous>, transform_indices = @transform_6, window_bounds = array<i64: 12, 128, 128>}, {pipeline_mode = #tpu.pipeline_mode<synchronous>, transform_indices = @transform_7, window_bounds = array<i64: 12, 1, 128>}, {transform_indices = @transform_8, window_bounds = array<i64: 8, 128>}]} {
    %c0 = arith.constant 0 : index
    %c0_0 = arith.constant 0 : index
    %0 = vector.load %arg1[%c0, %c0_0] : memref<8x2xf32, #tpu.memory_space<vmem>>, vector<8x2xf32>
    %c0_1 = arith.constant 0 : index
    %c0_2 = arith.constant 0 : index
    %1 = vector.load %arg2[%c0_1, %c0_2] : memref<8x2xf32, #tpu.memory_space<vmem>>, vector<8x2xf32>
    %c0_3 = arith.constant 0 : index
    %c0_4 = arith.constant 0 : index
    %2 = vector.load %arg3[%c0_3, %c0_4] : memref<2x128xf32, #tpu.memory_space<vmem>>, vector<2x128xf32>
    %3 = vector.extract_strided_slice %1 {offsets = [0, 0], sizes = [8, 1], strides = [1, 1]} : vector<8x2xf32> to vector<8x1xf32>
    %4 = vector.extract_strided_slice %2 {offsets = [0, 0], sizes = [1, 128], strides = [1, 1]} : vector<2x128xf32> to vector<1x128xf32>
    %5 = vector.broadcast %3 : vector<8x1xf32> to vector<8x128xf32>
    %6 = vector.broadcast %4 : vector<1x128xf32> to vector<8x128xf32>
    %7 = arith.mulf %5, %6 : vector<8x128xf32>
    %8 = vector.extract_strided_slice %1 {offsets = [0, 1], sizes = [8, 1], strides = [1, 1]} : vector<8x2xf32> to vector<8x1xf32>
    %9 = vector.extract_strided_slice %2 {offsets = [1, 0], sizes = [1, 128], strides = [1, 1]} : vector<2x128xf32> to vector<1x128xf32>
    %10 = vector.broadcast %8 : vector<8x1xf32> to vector<8x128xf32>
    %11 = vector.broadcast %9 : vector<1x128xf32> to vector<8x128xf32>
    %12 = arith.mulf %10, %11 : vector<8x128xf32>
    %13 = arith.addf %7, %12 : vector<8x128xf32>
    %c0_5 = arith.constant 0 : index
    %c0_6 = arith.constant 0 : index
    %14 = vector.load %arg4[%c0_5, %c0_6] : memref<1x128xf32, #tpu.memory_space<vmem>>, vector<1x128xf32>
    %15 = vector.broadcast %14 : vector<1x128xf32> to vector<8x128xf32>
    %16 = arith.addf %13, %15 : vector<8x128xf32>
    %17 = arith.negf %16 : vector<8x128xf32>
    %18 = math.exp %17 : vector<8x128xf32>
    %cst = arith.constant 1.000000e+00 : f32
    %19 = vector.broadcast %cst : f32 to vector<8x128xf32>
    %20 = arith.addf %19, %18 : vector<8x128xf32>
    %21 = arith.divf %19, %20 : vector<8x128xf32>
    %22 = arith.mulf %16, %21 : vector<8x128xf32>
    %23 = arith.truncf %22 : vector<8x128xf32> to vector<8x128xbf16>
    %c0_7 = arith.constant 0 : index
    %c0_8 = arith.constant 0 : index
    %c0_9 = arith.constant 0 : index
    %24 = vector.load %arg7[%c0_7, %c0_8, %c0_9] : memref<12x128x128xbf16, #tpu.memory_space<vmem>>, vector<1x128x128xbf16>
    %25 = vector.shape_cast %24 : vector<1x128x128xbf16> to vector<128x128xbf16>
    %cst_10 = arith.constant dense<0.000000e+00> : vector<8x128xf32>
    %26 = tpu.matmul %23, %25, %cst_10 {dimension_numbers = #tpu.dot_dimension_numbers<[1], [0], [0], [1], [0, 0, 1, 1], [], []>} : vector<8x128xbf16>, vector<128x128xbf16>, vector<8x128xf32> -> vector<8x128xf32>
    %c0_11 = arith.constant 0 : index
    %c0_12 = arith.constant 0 : index
    %c0_13 = arith.constant 0 : index
    %27 = vector.load %arg8[%c0_11, %c0_12, %c0_13] : memref<12x1x128xf32, #tpu.memory_space<vmem>>, vector<1x1x128xf32>
    %28 = vector.shape_cast %27 : vector<1x1x128xf32> to vector<1x128xf32>
    %29 = vector.broadcast %28 : vector<1x128xf32> to vector<8x128xf32>
    %30 = arith.addf %26, %29 : vector<8x128xf32>
    %c0_14 = arith.constant 0 : index
    %c0_15 = arith.constant 0 : index
    %31 = vector.load %arg5[%c0_14, %c0_15] : memref<2x128xf32, #tpu.memory_space<vmem>>, vector<2x128xf32>
    %32 = vector.extract_strided_slice %0 {offsets = [0, 0], sizes = [8, 1], strides = [1, 1]} : vector<8x2xf32> to vector<8x1xf32>
    %33 = vector.extract_strided_slice %31 {offsets = [0, 0], sizes = [1, 128], strides = [1, 1]} : vector<2x128xf32> to vector<1x128xf32>
    %34 = vector.broadcast %32 : vector<8x1xf32> to vector<8x128xf32>
    %35 = vector.broadcast %33 : vector<1x128xf32> to vector<8x128xf32>
    %36 = arith.mulf %34, %35 : vector<8x128xf32>
    %37 = vector.extract_strided_slice %0 {offsets = [0, 1], sizes = [8, 1], strides = [1, 1]} : vector<8x2xf32> to vector<8x1xf32>
    %38 = vector.extract_strided_slice %31 {offsets = [1, 0], sizes = [1, 128], strides = [1, 1]} : vector<2x128xf32> to vector<1x128xf32>
    %39 = vector.broadcast %37 : vector<8x1xf32> to vector<8x128xf32>
    %40 = vector.broadcast %38 : vector<1x128xf32> to vector<8x128xf32>
    %41 = arith.mulf %39, %40 : vector<8x128xf32>
    %42 = arith.addf %36, %41 : vector<8x128xf32>
    %c0_16 = arith.constant 0 : index
    %c0_17 = arith.constant 0 : index
    %43 = vector.load %arg6[%c0_16, %c0_17] : memref<1x128xf32, #tpu.memory_space<vmem>>, vector<1x128xf32>
    %44 = vector.broadcast %43 : vector<1x128xf32> to vector<8x128xf32>
    %45 = arith.addf %42, %44 : vector<8x128xf32>
    %46 = arith.truncf %45 : vector<8x128xf32> to vector<8x128xbf16>
    %c1 = arith.constant 1 : index
    %c0_18 = arith.constant 0 : index
    %c0_19 = arith.constant 0 : index
    %47 = vector.load %arg7[%c1, %c0_18, %c0_19] : memref<12x128x128xbf16, #tpu.memory_space<vmem>>, vector<1x128x128xbf16>
    %48 = vector.shape_cast %47 : vector<1x128x128xbf16> to vector<128x128xbf16>
    %cst_20 = arith.constant dense<0.000000e+00> : vector<8x128xf32>
    %49 = tpu.matmul %46, %48, %cst_20 {dimension_numbers = #tpu.dot_dimension_numbers<[1], [0], [0], [1], [0, 0, 1, 1], [], []>} : vector<8x128xbf16>, vector<128x128xbf16>, vector<8x128xf32> -> vector<8x128xf32>
    %c1_21 = arith.constant 1 : index
    %c0_22 = arith.constant 0 : index
    %c0_23 = arith.constant 0 : index
    %50 = vector.load %arg8[%c1_21, %c0_22, %c0_23] : memref<12x1x128xf32, #tpu.memory_space<vmem>>, vector<1x1x128xf32>
    %51 = vector.shape_cast %50 : vector<1x1x128xf32> to vector<1x128xf32>
    %52 = vector.broadcast %51 : vector<1x128xf32> to vector<8x128xf32>
    %53 = arith.addf %49, %52 : vector<8x128xf32>
    %54 = arith.negf %53 : vector<8x128xf32>
    %55 = math.exp %54 : vector<8x128xf32>
    %cst_24 = arith.constant 1.000000e+00 : f32
    %56 = vector.broadcast %cst_24 : f32 to vector<8x128xf32>
    %57 = arith.addf %56, %55 : vector<8x128xf32>
    %58 = arith.divf %56, %57 : vector<8x128xf32>
    %59 = arith.mulf %53, %58 : vector<8x128xf32>
    %60 = arith.truncf %59 : vector<8x128xf32> to vector<8x128xbf16>
    %c2 = arith.constant 2 : index
    %c0_25 = arith.constant 0 : index
    %c0_26 = arith.constant 0 : index
    %61 = vector.load %arg7[%c2, %c0_25, %c0_26] : memref<12x128x128xbf16, #tpu.memory_space<vmem>>, vector<1x128x128xbf16>
    %62 = vector.shape_cast %61 : vector<1x128x128xbf16> to vector<128x128xbf16>
    %cst_27 = arith.constant dense<0.000000e+00> : vector<8x128xf32>
    %63 = tpu.matmul %60, %62, %cst_27 {dimension_numbers = #tpu.dot_dimension_numbers<[1], [0], [0], [1], [0, 0, 1, 1], [], []>} : vector<8x128xbf16>, vector<128x128xbf16>, vector<8x128xf32> -> vector<8x128xf32>
    %c2_28 = arith.constant 2 : index
    %c0_29 = arith.constant 0 : index
    %c0_30 = arith.constant 0 : index
    %64 = vector.load %arg8[%c2_28, %c0_29, %c0_30] : memref<12x1x128xf32, #tpu.memory_space<vmem>>, vector<1x1x128xf32>
    %65 = vector.shape_cast %64 : vector<1x1x128xf32> to vector<1x128xf32>
    %66 = vector.broadcast %65 : vector<1x128xf32> to vector<8x128xf32>
    %67 = arith.addf %63, %66 : vector<8x128xf32>
    %68 = arith.negf %67 : vector<8x128xf32>
    %69 = math.exp %68 : vector<8x128xf32>
    %cst_31 = arith.constant 1.000000e+00 : f32
    %70 = vector.broadcast %cst_31 : f32 to vector<8x128xf32>
    %71 = arith.addf %70, %69 : vector<8x128xf32>
    %72 = arith.divf %70, %71 : vector<8x128xf32>
    %73 = arith.mulf %67, %72 : vector<8x128xf32>
    %74 = arith.truncf %73 : vector<8x128xf32> to vector<8x128xbf16>
    %c3 = arith.constant 3 : index
    %c0_32 = arith.constant 0 : index
    %c0_33 = arith.constant 0 : index
    %75 = vector.load %arg7[%c3, %c0_32, %c0_33] : memref<12x128x128xbf16, #tpu.memory_space<vmem>>, vector<1x128x128xbf16>
    %76 = vector.shape_cast %75 : vector<1x128x128xbf16> to vector<128x128xbf16>
    %cst_34 = arith.constant dense<0.000000e+00> : vector<8x128xf32>
    %77 = tpu.matmul %74, %76, %cst_34 {dimension_numbers = #tpu.dot_dimension_numbers<[1], [0], [0], [1], [0, 0, 1, 1], [], []>} : vector<8x128xbf16>, vector<128x128xbf16>, vector<8x128xf32> -> vector<8x128xf32>
    %c3_35 = arith.constant 3 : index
    %c0_36 = arith.constant 0 : index
    %c0_37 = arith.constant 0 : index
    %78 = vector.load %arg8[%c3_35, %c0_36, %c0_37] : memref<12x1x128xf32, #tpu.memory_space<vmem>>, vector<1x1x128xf32>
    %79 = vector.shape_cast %78 : vector<1x1x128xf32> to vector<1x128xf32>
    %80 = vector.broadcast %79 : vector<1x128xf32> to vector<8x128xf32>
    %81 = arith.addf %77, %80 : vector<8x128xf32>
    %82 = arith.negf %81 : vector<8x128xf32>
    %83 = math.exp %82 : vector<8x128xf32>
    %cst_38 = arith.constant 1.000000e+00 : f32
    %84 = vector.broadcast %cst_38 : f32 to vector<8x128xf32>
    %85 = arith.addf %84, %83 : vector<8x128xf32>
    %86 = arith.divf %84, %85 : vector<8x128xf32>
    %87 = arith.mulf %81, %86 : vector<8x128xf32>
    %88 = arith.addf %45, %87 : vector<8x128xf32>
    %cst_39 = arith.constant 0.707106769 : f32
    %89 = vector.broadcast %cst_39 : f32 to vector<8x128xf32>
    %90 = arith.mulf %88, %89 : vector<8x128xf32>
    %91 = arith.truncf %90 : vector<8x128xf32> to vector<8x128xbf16>
    %c4 = arith.constant 4 : index
    %c0_40 = arith.constant 0 : index
    %c0_41 = arith.constant 0 : index
    %92 = vector.load %arg7[%c4, %c0_40, %c0_41] : memref<12x128x128xbf16, #tpu.memory_space<vmem>>, vector<1x128x128xbf16>
    %93 = vector.shape_cast %92 : vector<1x128x128xbf16> to vector<128x128xbf16>
    %cst_42 = arith.constant dense<0.000000e+00> : vector<8x128xf32>
    %94 = tpu.matmul %91, %93, %cst_42 {dimension_numbers = #tpu.dot_dimension_numbers<[1], [0], [0], [1], [0, 0, 1, 1], [], []>} : vector<8x128xbf16>, vector<128x128xbf16>, vector<8x128xf32> -> vector<8x128xf32>
    %c4_43 = arith.constant 4 : index
    %c0_44 = arith.constant 0 : index
    %c0_45 = arith.constant 0 : index
    %95 = vector.load %arg8[%c4_43, %c0_44, %c0_45] : memref<12x1x128xf32, #tpu.memory_space<vmem>>, vector<1x1x128xf32>
    %96 = vector.shape_cast %95 : vector<1x1x128xf32> to vector<1x128xf32>
    %97 = vector.broadcast %96 : vector<1x128xf32> to vector<8x128xf32>
    %98 = arith.addf %94, %97 : vector<8x128xf32>
    %99 = arith.negf %98 : vector<8x128xf32>
    %100 = math.exp %99 : vector<8x128xf32>
    %cst_46 = arith.constant 1.000000e+00 : f32
    %101 = vector.broadcast %cst_46 : f32 to vector<8x128xf32>
    %102 = arith.addf %101, %100 : vector<8x128xf32>
    %103 = arith.divf %101, %102 : vector<8x128xf32>
    %104 = arith.mulf %98, %103 : vector<8x128xf32>
    %105 = arith.truncf %104 : vector<8x128xf32> to vector<8x128xbf16>
    %c5 = arith.constant 5 : index
    %c0_47 = arith.constant 0 : index
    %c0_48 = arith.constant 0 : index
    %106 = vector.load %arg7[%c5, %c0_47, %c0_48] : memref<12x128x128xbf16, #tpu.memory_space<vmem>>, vector<1x128x128xbf16>
    %107 = vector.shape_cast %106 : vector<1x128x128xbf16> to vector<128x128xbf16>
    %cst_49 = arith.constant dense<0.000000e+00> : vector<8x128xf32>
    %108 = tpu.matmul %105, %107, %cst_49 {dimension_numbers = #tpu.dot_dimension_numbers<[1], [0], [0], [1], [0, 0, 1, 1], [], []>} : vector<8x128xbf16>, vector<128x128xbf16>, vector<8x128xf32> -> vector<8x128xf32>
    %c5_50 = arith.constant 5 : index
    %c0_51 = arith.constant 0 : index
    %c0_52 = arith.constant 0 : index
    %109 = vector.load %arg8[%c5_50, %c0_51, %c0_52] : memref<12x1x128xf32, #tpu.memory_space<vmem>>, vector<1x1x128xf32>
    %110 = vector.shape_cast %109 : vector<1x1x128xf32> to vector<1x128xf32>
    %111 = vector.broadcast %110 : vector<1x128xf32> to vector<8x128xf32>
    %112 = arith.addf %108, %111 : vector<8x128xf32>
    %113 = arith.negf %112 : vector<8x128xf32>
    %114 = math.exp %113 : vector<8x128xf32>
    %cst_53 = arith.constant 1.000000e+00 : f32
    %115 = vector.broadcast %cst_53 : f32 to vector<8x128xf32>
    %116 = arith.addf %115, %114 : vector<8x128xf32>
    %117 = arith.divf %115, %116 : vector<8x128xf32>
    %118 = arith.mulf %112, %117 : vector<8x128xf32>
    %119 = arith.truncf %118 : vector<8x128xf32> to vector<8x128xbf16>
    %c6 = arith.constant 6 : index
    %c0_54 = arith.constant 0 : index
    %c0_55 = arith.constant 0 : index
    %120 = vector.load %arg7[%c6, %c0_54, %c0_55] : memref<12x128x128xbf16, #tpu.memory_space<vmem>>, vector<1x128x128xbf16>
    %121 = vector.shape_cast %120 : vector<1x128x128xbf16> to vector<128x128xbf16>
    %cst_56 = arith.constant dense<0.000000e+00> : vector<8x128xf32>
    %122 = tpu.matmul %119, %121, %cst_56 {dimension_numbers = #tpu.dot_dimension_numbers<[1], [0], [0], [1], [0, 0, 1, 1], [], []>} : vector<8x128xbf16>, vector<128x128xbf16>, vector<8x128xf32> -> vector<8x128xf32>
    %c6_57 = arith.constant 6 : index
    %c0_58 = arith.constant 0 : index
    %c0_59 = arith.constant 0 : index
    %123 = vector.load %arg8[%c6_57, %c0_58, %c0_59] : memref<12x1x128xf32, #tpu.memory_space<vmem>>, vector<1x1x128xf32>
    %124 = vector.shape_cast %123 : vector<1x1x128xf32> to vector<1x128xf32>
    %125 = vector.broadcast %124 : vector<1x128xf32> to vector<8x128xf32>
    %126 = arith.addf %122, %125 : vector<8x128xf32>
    %127 = arith.negf %126 : vector<8x128xf32>
    %128 = math.exp %127 : vector<8x128xf32>
    %cst_60 = arith.constant 1.000000e+00 : f32
    %129 = vector.broadcast %cst_60 : f32 to vector<8x128xf32>
    %130 = arith.addf %129, %128 : vector<8x128xf32>
    %131 = arith.divf %129, %130 : vector<8x128xf32>
    %132 = arith.mulf %126, %131 : vector<8x128xf32>
    %133 = arith.addf %90, %132 : vector<8x128xf32>
    %cst_61 = arith.constant 0.707106769 : f32
    %134 = vector.broadcast %cst_61 : f32 to vector<8x128xf32>
    %135 = arith.mulf %133, %134 : vector<8x128xf32>
    %136 = arith.truncf %135 : vector<8x128xf32> to vector<8x128xbf16>
    %c7 = arith.constant 7 : index
    %c0_62 = arith.constant 0 : index
    %c0_63 = arith.constant 0 : index
    %137 = vector.load %arg7[%c7, %c0_62, %c0_63] : memref<12x128x128xbf16, #tpu.memory_space<vmem>>, vector<1x128x128xbf16>
    %138 = vector.shape_cast %137 : vector<1x128x128xbf16> to vector<128x128xbf16>
    %cst_64 = arith.constant dense<0.000000e+00> : vector<8x128xf32>
    %139 = tpu.matmul %136, %138, %cst_64 {dimension_numbers = #tpu.dot_dimension_numbers<[1], [0], [0], [1], [0, 0, 1, 1], [], []>} : vector<8x128xbf16>, vector<128x128xbf16>, vector<8x128xf32> -> vector<8x128xf32>
    %c7_65 = arith.constant 7 : index
    %c0_66 = arith.constant 0 : index
    %c0_67 = arith.constant 0 : index
    %140 = vector.load %arg8[%c7_65, %c0_66, %c0_67] : memref<12x1x128xf32, #tpu.memory_space<vmem>>, vector<1x1x128xf32>
    %141 = vector.shape_cast %140 : vector<1x1x128xf32> to vector<1x128xf32>
    %142 = vector.broadcast %141 : vector<1x128xf32> to vector<8x128xf32>
    %143 = arith.addf %139, %142 : vector<8x128xf32>
    %144 = arith.negf %143 : vector<8x128xf32>
    %145 = math.exp %144 : vector<8x128xf32>
    %cst_68 = arith.constant 1.000000e+00 : f32
    %146 = vector.broadcast %cst_68 : f32 to vector<8x128xf32>
    %147 = arith.addf %146, %145 : vector<8x128xf32>
    %148 = arith.divf %146, %147 : vector<8x128xf32>
    %149 = arith.mulf %143, %148 : vector<8x128xf32>
    %150 = arith.truncf %149 : vector<8x128xf32> to vector<8x128xbf16>
    %c8 = arith.constant 8 : index
    %c0_69 = arith.constant 0 : index
    %c0_70 = arith.constant 0 : index
    %151 = vector.load %arg7[%c8, %c0_69, %c0_70] : memref<12x128x128xbf16, #tpu.memory_space<vmem>>, vector<1x128x128xbf16>
    %152 = vector.shape_cast %151 : vector<1x128x128xbf16> to vector<128x128xbf16>
    %cst_71 = arith.constant dense<0.000000e+00> : vector<8x128xf32>
    %153 = tpu.matmul %150, %152, %cst_71 {dimension_numbers = #tpu.dot_dimension_numbers<[1], [0], [0], [1], [0, 0, 1, 1], [], []>} : vector<8x128xbf16>, vector<128x128xbf16>, vector<8x128xf32> -> vector<8x128xf32>
    %c8_72 = arith.constant 8 : index
    %c0_73 = arith.constant 0 : index
    %c0_74 = arith.constant 0 : index
    %154 = vector.load %arg8[%c8_72, %c0_73, %c0_74] : memref<12x1x128xf32, #tpu.memory_space<vmem>>, vector<1x1x128xf32>
    %155 = vector.shape_cast %154 : vector<1x1x128xf32> to vector<1x128xf32>
    %156 = vector.broadcast %155 : vector<1x128xf32> to vector<8x128xf32>
    %157 = arith.addf %153, %156 : vector<8x128xf32>
    %158 = arith.negf %157 : vector<8x128xf32>
    %159 = math.exp %158 : vector<8x128xf32>
    %cst_75 = arith.constant 1.000000e+00 : f32
    %160 = vector.broadcast %cst_75 : f32 to vector<8x128xf32>
    %161 = arith.addf %160, %159 : vector<8x128xf32>
    %162 = arith.divf %160, %161 : vector<8x128xf32>
    %163 = arith.mulf %157, %162 : vector<8x128xf32>
    %164 = arith.truncf %163 : vector<8x128xf32> to vector<8x128xbf16>
    %c9 = arith.constant 9 : index
    %c0_76 = arith.constant 0 : index
    %c0_77 = arith.constant 0 : index
    %165 = vector.load %arg7[%c9, %c0_76, %c0_77] : memref<12x128x128xbf16, #tpu.memory_space<vmem>>, vector<1x128x128xbf16>
    %166 = vector.shape_cast %165 : vector<1x128x128xbf16> to vector<128x128xbf16>
    %cst_78 = arith.constant dense<0.000000e+00> : vector<8x128xf32>
    %167 = tpu.matmul %164, %166, %cst_78 {dimension_numbers = #tpu.dot_dimension_numbers<[1], [0], [0], [1], [0, 0, 1, 1], [], []>} : vector<8x128xbf16>, vector<128x128xbf16>, vector<8x128xf32> -> vector<8x128xf32>
    %c9_79 = arith.constant 9 : index
    %c0_80 = arith.constant 0 : index
    %c0_81 = arith.constant 0 : index
    %168 = vector.load %arg8[%c9_79, %c0_80, %c0_81] : memref<12x1x128xf32, #tpu.memory_space<vmem>>, vector<1x1x128xf32>
    %169 = vector.shape_cast %168 : vector<1x1x128xf32> to vector<1x128xf32>
    %170 = vector.broadcast %169 : vector<1x128xf32> to vector<8x128xf32>
    %171 = arith.addf %167, %170 : vector<8x128xf32>
    %172 = arith.negf %171 : vector<8x128xf32>
    %173 = math.exp %172 : vector<8x128xf32>
    %cst_82 = arith.constant 1.000000e+00 : f32
    %174 = vector.broadcast %cst_82 : f32 to vector<8x128xf32>
    %175 = arith.addf %174, %173 : vector<8x128xf32>
    %176 = arith.divf %174, %175 : vector<8x128xf32>
    %177 = arith.mulf %171, %176 : vector<8x128xf32>
    %178 = arith.addf %135, %177 : vector<8x128xf32>
    %cst_83 = arith.constant 0.707106769 : f32
    %179 = vector.broadcast %cst_83 : f32 to vector<8x128xf32>
    %180 = arith.mulf %178, %179 : vector<8x128xf32>
    %181 = arith.addf %180, %30 : vector<8x128xf32>
    %182 = arith.truncf %181 : vector<8x128xf32> to vector<8x128xbf16>
    %c10 = arith.constant 10 : index
    %c0_84 = arith.constant 0 : index
    %c0_85 = arith.constant 0 : index
    %183 = vector.load %arg7[%c10, %c0_84, %c0_85] : memref<12x128x128xbf16, #tpu.memory_space<vmem>>, vector<1x128x128xbf16>
    %184 = vector.shape_cast %183 : vector<1x128x128xbf16> to vector<128x128xbf16>
    %cst_86 = arith.constant dense<0.000000e+00> : vector<8x128xf32>
    %185 = tpu.matmul %182, %184, %cst_86 {dimension_numbers = #tpu.dot_dimension_numbers<[1], [0], [0], [1], [0, 0, 1, 1], [], []>} : vector<8x128xbf16>, vector<128x128xbf16>, vector<8x128xf32> -> vector<8x128xf32>
    %c10_87 = arith.constant 10 : index
    %c0_88 = arith.constant 0 : index
    %c0_89 = arith.constant 0 : index
    %186 = vector.load %arg8[%c10_87, %c0_88, %c0_89] : memref<12x1x128xf32, #tpu.memory_space<vmem>>, vector<1x1x128xf32>
    %187 = vector.shape_cast %186 : vector<1x1x128xf32> to vector<1x128xf32>
    %188 = vector.broadcast %187 : vector<1x128xf32> to vector<8x128xf32>
    %189 = arith.addf %185, %188 : vector<8x128xf32>
    %190 = arith.negf %189 : vector<8x128xf32>
    %191 = math.exp %190 : vector<8x128xf32>
    %cst_90 = arith.constant 1.000000e+00 : f32
    %192 = vector.broadcast %cst_90 : f32 to vector<8x128xf32>
    %193 = arith.addf %192, %191 : vector<8x128xf32>
    %194 = arith.divf %192, %193 : vector<8x128xf32>
    %195 = arith.mulf %189, %194 : vector<8x128xf32>
    %196 = arith.truncf %195 : vector<8x128xf32> to vector<8x128xbf16>
    %c11 = arith.constant 11 : index
    %c0_91 = arith.constant 0 : index
    %c0_92 = arith.constant 0 : index
    %197 = vector.load %arg7[%c11, %c0_91, %c0_92] : memref<12x128x128xbf16, #tpu.memory_space<vmem>>, vector<1x128x128xbf16>
    %198 = vector.shape_cast %197 : vector<1x128x128xbf16> to vector<128x128xbf16>
    %cst_93 = arith.constant dense<0.000000e+00> : vector<8x128xf32>
    %199 = tpu.matmul %196, %198, %cst_93 {dimension_numbers = #tpu.dot_dimension_numbers<[1], [0], [0], [1], [0, 0, 1, 1], [], []>} : vector<8x128xbf16>, vector<128x128xbf16>, vector<8x128xf32> -> vector<8x128xf32>
    %c11_94 = arith.constant 11 : index
    %c0_95 = arith.constant 0 : index
    %c0_96 = arith.constant 0 : index
    %200 = vector.load %arg8[%c11_94, %c0_95, %c0_96] : memref<12x1x128xf32, #tpu.memory_space<vmem>>, vector<1x1x128xf32>
    %201 = vector.shape_cast %200 : vector<1x1x128xf32> to vector<1x128xf32>
    %202 = vector.broadcast %201 : vector<1x128xf32> to vector<8x128xf32>
    %203 = arith.addf %199, %202 : vector<8x128xf32>
    %c0_97 = arith.constant 0 : index
    %c0_98 = arith.constant 0 : index
    %204 = vector.load %arg9[%c0_97, %c0_98] : memref<8x128xf32, #tpu.memory_space<vmem>>, vector<8x128xf32>
    tpu.vector_store %arg9[%c0_97, %c0_98], %203 {strides = array<i32>} : memref<8x128xf32, #tpu.memory_space<vmem>>, vector<8x128xf32>,
    return
  }
  func.func @transform_0(%arg0: i32) -> (i32, i32) {
    %c0_i32 = arith.constant 0 : i32
    %c0_i32_0 = arith.constant 0 : i32
    return %arg0, %c0_i32 : i32, i32
  }
  func.func @transform_1(%arg0: i32) -> (i32, i32) {
    %c0_i32 = arith.constant 0 : i32
    %c0_i32_0 = arith.constant 0 : i32
    return %arg0, %c0_i32 : i32, i32
  }
  func.func @transform_2(%arg0: i32) -> (i32, i32) {
    %c0_i32 = arith.constant 0 : i32
    %c0_i32_0 = arith.constant 0 : i32
    %c0_i32_1 = arith.constant 0 : i32
    return %c0_i32, %c0_i32_0 : i32, i32
  }
  func.func @transform_3(%arg0: i32) -> (i32, i32) {
    %c0_i32 = arith.constant 0 : i32
    %c0_i32_0 = arith.constant 0 : i32
    %c0_i32_1 = arith.constant 0 : i32
    return %c0_i32, %c0_i32_0 : i32, i32
  }
  func.func @transform_4(%arg0: i32) -> (i32, i32) {
    %c0_i32 = arith.constant 0 : i32
    %c0_i32_0 = arith.constant 0 : i32
    %c0_i32_1 = arith.constant 0 : i32
    return %c0_i32, %c0_i32_0 : i32, i32
  }
  func.func @transform_5(%arg0: i32) -> (i32, i32) {
    %c0_i32 = arith.constant 0 : i32
    %c0_i32_0 = arith.constant 0 : i32
    %c0_i32_1 = arith.constant 0 : i32
    return %c0_i32, %c0_i32_0 : i32, i32
  }
  func.func @transform_6(%arg0: i32) -> (i32, i32, i32) {
    %c0_i32 = arith.constant 0 : i32
    %c0_i32_0 = arith.constant 0 : i32
    %c0_i32_1 = arith.constant 0 : i32
    %c0_i32_2 = arith.constant 0 : i32
    return %c0_i32, %c0_i32_0, %c0_i32_1 : i32, i32, i32
  }
  func.func @transform_7(%arg0: i32) -> (i32, i32, i32) {
    %c0_i32 = arith.constant 0 : i32
    %c0_i32_0 = arith.constant 0 : i32
    %c0_i32_1 = arith.constant 0 : i32
    %c0_i32_2 = arith.constant 0 : i32
    return %c0_i32, %c0_i32_0, %c0_i32_1 : i32, i32, i32
  }
  func.func @transform_8(%arg0: i32) -> (i32, i32) {
    %c0_i32 = arith.constant 0 : i32
    %c0_i32_0 = arith.constant 0 : i32
    return %arg0, %c0_i32 : i32, i32
  }
}

</mosaic_0001>

<llo_original>
// kernel: tpu_custom_call.1
$region0: #{tpu_custom_call.1}
  #allocation0 [shape = 'u32[]', space=smem, size = 0x4, offset = 0x4, fixed_abs, tag = 'smem constant byte address 0x4 - core index']
  #allocation1 [shape = 'u32[72,128]{1,0:T(1,128)}', space=vmem, size = 0x9000, scoped, tag = 'internal scratch']
  %s0 = inlined_call_operand.vmem [shape: f32[8,2], index: 0, kind: input, shape index: {}]
  %s1 = inlined_call_operand.vmem [shape: f32[8,2], index: 1, kind: input, shape index: {}]
  %s2 = inlined_call_operand.vmem [shape: f32[2,128], index: 2, kind: input, shape index: {}]
  %s3 = inlined_call_operand.vmem [shape: f32[1,128], index: 3, kind: input, shape index: {}]
  %s4 = inlined_call_operand.vmem [shape: f32[2,128], index: 4, kind: input, shape index: {}]
  %s5 = inlined_call_operand.vmem [shape: f32[1,128], index: 5, kind: input, shape index: {}]
  %s6 = inlined_call_operand.hbm [shape: bf16[12,128,128], index: 6, kind: input, shape index: {}]
  %s7 = inlined_call_operand.vmem [shape: f32[12,1,128], index: 7, kind: input, shape index: {}]
  %s8 = inlined_call_operand.hbm [shape: f32[8,128], index: 8, kind: output, shape index: {}]
  %s9 = sld [smem:[#allocation0]]
  $region46: #{tpu_custom_call.1} parent=0
    _
  %s11 = ssub.s32 1, %s9
  %s12 = scalar_select 0, %s11, %s9
  $region1: #{tpu_custom_call.1} parent=0
    #allocation2 [shape = 'u8[393216]{0}', space=vmem, size = 0x60000, scoped, tag = 'input window, operand 6, single buffered']
    #allocation3 [shape = 's32[1]{0}', space=sflag, size = 0x4, scoped, tag = 'scoped memory for tpu_custom_call.1']
    #allocation4 [shape = 's32[1]{0}', space=sflag, size = 0x4, scoped, tag = 'scoped memory for tpu_custom_call.1']
    #allocation5 [shape = 'u8[4096]{0}', space=vmem, size = 0x1000, scoped, tag = 'output window, operand 0, single buffered']
    %13 = vsyncpa [#allocation3], 0
    %14 = vsyncpa [#allocation4], 0
    // Predicated region
    $region2: #{tpu_custom_call.1} parent=1 // pred_check
      _
    $region3: #{tpu_custom_call.1} parent=1 // pred_check_branch
      %16 = sbr.rel (0) target = $region5
    $region4: #{tpu_custom_call.1} parent=1 // pred_region
      _
    $region5: #{tpu_custom_call.1} parent=1 // pred_fallthru
      _
    // Predicated region
    $region6: #{tpu_custom_call.1} parent=1 // pred_check
      _
    $region7: #{tpu_custom_call.1} parent=1 // pred_check_branch
      %18 = sbr.rel (0) target = $region9
    $region8: #{tpu_custom_call.1} parent=1 // pred_region
      _
    $region9: #{tpu_custom_call.1} parent=1 // pred_fallthru
      _
    // Predicated region
    $region10: #{tpu_custom_call.1} parent=1 // pred_check
      _
    $region11: #{tpu_custom_call.1} parent=1 // pred_check_branch
      %20 = sbr.rel (0) target = $region13
    $region12: #{tpu_custom_call.1} parent=1 // pred_region
      _
    $region13: #{tpu_custom_call.1} parent=1 // pred_fallthru
      _
    // Predicated region
    $region14: #{tpu_custom_call.1} parent=1 // pred_check
      _
    $region15: #{tpu_custom_call.1} parent=1 // pred_check_branch
      %22 = sbr.rel (0) target = $region17
    $region16: #{tpu_custom_call.1} parent=1 // pred_region
      _
    $region17: #{tpu_custom_call.1} parent=1 // pred_fallthru
      _
    // Predicated region
    $region18: #{tpu_custom_call.1} parent=1 // pred_check
      _
    $region19: #{tpu_custom_call.1} parent=1 // pred_check_branch
      %24 = sbr.rel (0) target = $region21
    $region20: #{tpu_custom_call.1} parent=1 // pred_region
      _
    $region21: #{tpu_custom_call.1} parent=1 // pred_fallthru
      _
    // Predicated region
    $region22: #{tpu_custom_call.1} parent=1 // pred_check
      _
    $region23: #{tpu_custom_call.1} parent=1 // pred_check_branch
      %26 = sbr.rel (0) target = $region25
    $region24: #{tpu_custom_call.1} parent=1 // pred_region
      _
    $region25: #{tpu_custom_call.1} parent=1 // pred_fallthru
      _
    // Predicated region
    $region26: #{tpu_custom_call.1} parent=1 // pred_check
      _
    $region27: #{tpu_custom_call.1} parent=1 // pred_check_branch
      %28 = sbr.rel (0) target = $region29
    $region28: #{tpu_custom_call.1} parent=1 // pred_region
      %30 = vsyncadd [#allocation3], 0
      %s31 = sshll.u32 %s6, 4
      %s32 = int_to_ptr.hbm [resolvable:$true] %s31
      %s33 = sshll.u32 [#allocation2], 4
      %s34 = int_to_ptr.vmem [resolvable:$true] %s33
      %39 = dma.hbm_to_vmem [thread:$0]  %s32, 12288, %s34, [#allocation3], 64, 64, 4
    $region29: #{tpu_custom_call.1} parent=1 // pred_fallthru
      _
    // Predicated region
    $region30: #{tpu_custom_call.1} parent=1 // pred_check
      _
    $region31: #{tpu_custom_call.1} parent=1 // pred_check_branch
      %41 = sbr.rel (0) target = $region33
    $region32: #{tpu_custom_call.1} parent=1 // pred_region
      _
    $region33: #{tpu_custom_call.1} parent=1 // pred_fallthru
      _
    // Predicated region
    $region34: #{tpu_custom_call.1} parent=1 // pred_check
      _
    $region35: #{tpu_custom_call.1} parent=1 // pred_check_branch
      %43 = sbr.rel (0) target = $region37
    $region36: #{tpu_custom_call.1} parent=1 // pred_region
      %45 = dma.done [#allocation3], 12288
    $region37: #{tpu_custom_call.1} parent=1 // pred_fallthru
      _
    %v46 = vld [vmem:[%s0] sm:$0xff]
    %v47 = vld [vmem:[%s1] sm:$0xff]
    %v48 = vld [vmem:[%s2] sm:$0x3]
    %50 = vset.pattern.permute.xlu0 0
    %51 = vperm.xlu0 %50, %v47
    %v52 = vpop.permute.xlu0 %51
    %v54 = vperm.slane %v48, 0
    %v55 = vmul.f32 %v52, %v54
    %56 = vset.pattern.permute.xlu0 1
    %57 = vperm.xlu0 %56, %v47
    %v58 = vpop.permute.xlu0 %57
    %v60 = vperm.slane %v48, 1
    %v61 = vmul.f32 %v58, %v60
    %v62 = vadd.f32 %v55, %v61
    %v63 = vld [vmem:[%s3] sm:$0x1]
    %v65 = vperm.slane %v63, 0
    %v67 = vadd.f32 %v62, %v65
    %v68 = vxor.u32 %v67, 2147483648
    %v69 = vmul.f32 %v68, 1.442695
    %v70 = vpow.pop %v69
    %v71 = vadd.f32 %v70, 1.0
    %v72 = vrcp.pop %v71
    %v73 = vmul.f32 %v71, %v72
    %v74 = vsub.f32 1.0, %v73
    %v75 = vmul.f32 %v72, %v74
    %v76 = vadd.f32 %v72, %v75
    %vm77 = vweird.f32 %v71
    %vm78 = vweird.f32 %v72
    %vm79 = vmor %vm77, %vm78
    %v80 = vsel %vm79, %v72, %v76
    %v81 = vand.u32 2147483647, %v71
    %vm82 = vcmp.eq.f32.partialorder %v81, 8.507059e+37
    %v83 = vand.u32 %v71, 2147483648
    %v84 = vor.u32 1.1754944e-38, %v83
    %v85 = vsel %vm82, %v84, %v80
    %v86 = vmul.f32 1.0, %v85
    %v87 = vmul.f32 %v67, %v86
    %v88 = vpack.c.bf16 %v87, %v87
    %v89 = vld [vmem:[#allocation2] sm:$0xf]
    %v90 = vld [vmem:[#allocation2 + $0x4] sm:$0xf]
    %v91 = vld [vmem:[#allocation2 + $0x8] sm:$0xf]
    %v92 = vld [vmem:[#allocation2 + $0xc] sm:$0xf]
    %v93 = vld [vmem:[#allocation2 + $0x10] sm:$0xf]
    %v94 = vld [vmem:[#allocation2 + $0x14] sm:$0xf]
    %v95 = vld [vmem:[#allocation2 + $0x18] sm:$0xf]
    %v96 = vld [vmem:[#allocation2 + $0x1c] sm:$0xf]
    %v97 = vld [vmem:[#allocation2 + $0x20] sm:$0xf]
    %v98 = vld [vmem:[#allocation2 + $0x24] sm:$0xf]
    %v99 = vld [vmem:[#allocation2 + $0x28] sm:$0xf]
    %v100 = vld [vmem:[#allocation2 + $0x2c] sm:$0xf]
    %v101 = vld [vmem:[#allocation2 + $0x30] sm:$0xf]
    %v102 = vld [vmem:[#allocation2 + $0x34] sm:$0xf]
    %v103 = vld [vmem:[#allocation2 + $0x38] sm:$0xf]
    %v104 = vld [vmem:[#allocation2 + $0x3c] sm:$0xf]
    %v105 = vld [vmem:[%s7] sm:$0x1]
    %v107 = vperm.slane %v105, 0
    %v125 = vunpack.c.l.b16 %v89
    %v126 = vunpack.c.l.b16 %v90
    %v127 = vunpack.c.l.b16 %v91
    %v128 = vunpack.c.l.b16 %v92
    %v129 = vunpack.c.l.b16 %v93
    %v130 = vunpack.c.l.b16 %v94
    %v131 = vunpack.c.l.b16 %v95
    %v132 = vunpack.c.l.b16 %v96
    %v133 = vunpack.c.l.b16 %v97
    %v134 = vunpack.c.l.b16 %v98
    %v135 = vunpack.c.l.b16 %v99
    %v136 = vunpack.c.l.b16 %v100
    %v137 = vunpack.c.l.b16 %v101
    %v138 = vunpack.c.l.b16 %v102
    %v139 = vunpack.c.l.b16 %v103
    %v140 = vunpack.c.l.b16 %v104
    %v141 = vpack.c.b16 %v126, %v125
    %v142 = vpack.c.b16 %v128, %v127
    %v143 = vpack.c.b16 %v130, %v129
    %v144 = vpack.c.b16 %v132, %v131
    %v145 = vpack.c.b16 %v134, %v133
    %v146 = vpack.c.b16 %v136, %v135
    %v147 = vpack.c.b16 %v138, %v137
    %v148 = vpack.c.b16 %v140, %v139
    %157 = vmatpush.bf16.msra.mxu0 %v148
    %158 = vmatpush.bf16.msra.mxu0 %v147
    %159 = vmatpush.bf16.msra.mxu0 %v146
    %160 = vmatpush.bf16.msra.mxu0 %v145
    %161 = vmatpush.bf16.msra.mxu0 %v144
    %162 = vmatpush.bf16.msra.mxu0 %v143
    %163 = vmatpush.bf16.msra.mxu0 %v142
    %164 = vmatpush.bf16.msra.mxu0 %v141
    %165 = vmatmul.bf16.gmra.mxu0 %v88
    %v166 = vpop.f32.mrf.mxu0
    %v167 = vadd.f32 %v107, %v166
    %v168 = vpop.f32.mrf.mxu0
    %169 = vdwg.mxu0
    %v170 = vld [vmem:[%s4] sm:$0x3]
    %172 = vset.pattern.permute.xlu0 0
    %173 = vperm.xlu0 %172, %v46
    %v174 = vpop.permute.xlu0 %173
    %v176 = vperm.slane %v170, 0
    %v177 = vmul.f32 %v174, %v176
    %178 = vset.pattern.permute.xlu0 1
    %179 = vperm.xlu0 %178, %v46
    %v180 = vpop.permute.xlu0 %179
    %v182 = vperm.slane %v170, 1
    %v183 = vmul.f32 %v180, %v182
    %v184 = vadd.f32 %v177, %v183
    %v185 = vld [vmem:[%s5] sm:$0x1]
    %v187 = vperm.slane %v185, 0
    %v189 = vadd.f32 %v184, %v187
    %v190 = vpack.c.bf16 %v189, %v189
    %s191 = scalar_lea.vmem [#allocation2], 64
    %v192 = vld [vmem:[%s191] sm:$0xf]
    %v193 = vld [vmem:[%s191 + $0x4] sm:$0xf]
    %v194 = vld [vmem:[%s191 + $0x8] sm:$0xf]
    %v195 = vld [vmem:[%s191 + $0xc] sm:$0xf]
    %v196 = vld [vmem:[%s191 + $0x10] sm:$0xf]
    %v197 = vld [vmem:[%s191 + $0x14] sm:$0xf]
    %v198 = vld [vmem:[%s191 + $0x18] sm:$0xf]
    %v199 = vld [vmem:[%s191 + $0x1c] sm:$0xf]
    %v200 = vld [vmem:[%s191 + $0x20] sm:$0xf]
    %v201 = vld [vmem:[%s191 + $0x24] sm:$0xf]
    %v202 = vld [vmem:[%s191 + $0x28] sm:$0xf]
    %v203 = vld [vmem:[%s191 + $0x2c] sm:$0xf]
    %v204 = vld [vmem:[%s191 + $0x30] sm:$0xf]
    %v205 = vld [vmem:[%s191 + $0x34] sm:$0xf]
    %v206 = vld [vmem:[%s191 + $0x38] sm:$0xf]
    %v207 = vld [vmem:[%s191 + $0x3c] sm:$0xf]
    %s208 = scalar_lea.vmem %s7, 1
    %v209 = vld [vmem:[%s208] sm:$0x1]
    %v211 = vperm.slane %v209, 0
    %v229 = vunpack.c.l.b16 %v192
    %v230 = vunpack.c.l.b16 %v193
    %v231 = vunpack.c.l.b16 %v194
    %v232 = vunpack.c.l.b16 %v195
    %v233 = vunpack.c.l.b16 %v196
    %v234 = vunpack.c.l.b16 %v197
    %v235 = vunpack.c.l.b16 %v198
    %v236 = vunpack.c.l.b16 %v199
    %v237 = vunpack.c.l.b16 %v200
    %v238 = vunpack.c.l.b16 %v201
    %v239 = vunpack.c.l.b16 %v202
    %v240 = vunpack.c.l.b16 %v203
    %v241 = vunpack.c.l.b16 %v204
    %v242 = vunpack.c.l.b16 %v205
    %v243 = vunpack.c.l.b16 %v206
    %v244 = vunpack.c.l.b16 %v207
    %v245 = vpack.c.b16 %v230, %v229
    %v246 = vpack.c.b16 %v232, %v231
    %v247 = vpack.c.b16 %v234, %v233
    %v248 = vpack.c.b16 %v236, %v235
    %v249 = vpack.c.b16 %v238, %v237
    %v250 = vpack.c.b16 %v240, %v239
    %v251 = vpack.c.b16 %v242, %v241
    %v252 = vpack.c.b16 %v244, %v243
    %261 = vmatpush.bf16.msra.mxu0 %v252
    %262 = vmatpush.bf16.msra.mxu0 %v251
    %263 = vmatpush.bf16.msra.mxu0 %v250
    %264 = vmatpush.bf16.msra.mxu0 %v249
    %265 = vmatpush.bf16.msra.mxu0 %v248
    %266 = vmatpush.bf16.msra.mxu0 %v247
    %267 = vmatpush.bf16.msra.mxu0 %v246
    %268 = vmatpush.bf16.msra.mxu0 %v245
    %269 = vmatmul.bf16.gmra.mxu0 %v190
    %v270 = vpop.f32.mrf.mxu0
    %v271 = vadd.f32 %v211, %v270
    %v272 = vpop.f32.mrf.mxu0
    %273 = vdwg.mxu0
    %v274 = vxor.u32 %v271, 2147483648
    %v275 = vmul.f32 %v274, 1.442695
    %v276 = vpow.pop %v275
    %v277 = vadd.f32 %v276, 1.0
    %v278 = vrcp.pop %v277
    %v279 = vmul.f32 %v277, %v278
    %v280 = vsub.f32 1.0, %v279
    %v281 = vmul.f32 %v278, %v280
    %v282 = vadd.f32 %v278, %v281
    %vm283 = vweird.f32 %v277
    %vm284 = vweird.f32 %v278
    %vm285 = vmor %vm283, %vm284
    %v286 = vsel %vm285, %v278, %v282
    %v287 = vand.u32 2147483647, %v277
    %vm288 = vcmp.eq.f32.partialorder %v287, 8.507059e+37
    %v289 = vand.u32 %v277, 2147483648
    %v290 = vor.u32 1.1754944e-38, %v289
    %v291 = vsel %vm288, %v290, %v286
    %v292 = vmul.f32 1.0, %v291
    %v293 = vmul.f32 %v271, %v292
    %v294 = vpack.c.bf16 %v293, %v293
    %s295 = scalar_lea.vmem [#allocation2], 128
    %v296 = vld [vmem:[%s295] sm:$0xf]
    %v297 = vld [vmem:[%s295 + $0x4] sm:$0xf]
    %v298 = vld [vmem:[%s295 + $0x8] sm:$0xf]
    %v299 = vld [vmem:[%s295 + $0xc] sm:$0xf]
    %v300 = vld [vmem:[%s295 + $0x10] sm:$0xf]
    %v301 = vld [vmem:[%s295 + $0x14] sm:$0xf]
    %v302 = vld [vmem:[%s295 + $0x18] sm:$0xf]
    %v303 = vld [vmem:[%s295 + $0x1c] sm:$0xf]
    %v304 = vld [vmem:[%s295 + $0x20] sm:$0xf]
    %v305 = vld [vmem:[%s295 + $0x24] sm:$0xf]
    %v306 = vld [vmem:[%s295 + $0x28] sm:$0xf]
    %v307 = vld [vmem:[%s295 + $0x2c] sm:$0xf]
    %v308 = vld [vmem:[%s295 + $0x30] sm:$0xf]
    %v309 = vld [vmem:[%s295 + $0x34] sm:$0xf]
    %v310 = vld [vmem:[%s295 + $0x38] sm:$0xf]
    %v311 = vld [vmem:[%s295 + $0x3c] sm:$0xf]
    %s312 = scalar_lea.vmem %s7, 2
    %v313 = vld [vmem:[%s312] sm:$0x1]
    %v315 = vperm.slane %v313, 0
    %v333 = vunpack.c.l.b16 %v296
    %v334 = vunpack.c.l.b16 %v297
    %v335 = vunpack.c.l.b16 %v298
    %v336 = vunpack.c.l.b16 %v299
    %v337 = vunpack.c.l.b16 %v300
    %v338 = vunpack.c.l.b16 %v301
    %v339 = vunpack.c.l.b16 %v302
    %v340 = vunpack.c.l.b16 %v303
    %v341 = vunpack.c.l.b16 %v304
    %v342 = vunpack.c.l.b16 %v305
    %v343 = vunpack.c.l.b16 %v306
    %v344 = vunpack.c.l.b16 %v307
    %v345 = vunpack.c.l.b16 %v308
    %v346 = vunpack.c.l.b16 %v309
    %v347 = vunpack.c.l.b16 %v310
    %v348 = vunpack.c.l.b16 %v311
    %v349 = vpack.c.b16 %v334, %v333
    %v350 = vpack.c.b16 %v336, %v335
    %v351 = vpack.c.b16 %v338, %v337
    %v352 = vpack.c.b16 %v340, %v339
    %v353 = vpack.c.b16 %v342, %v341
    %v354 = vpack.c.b16 %v344, %v343
    %v355 = vpack.c.b16 %v346, %v345
    %v356 = vpack.c.b16 %v348, %v347
    %365 = vmatpush.bf16.msra.mxu0 %v356
    %366 = vmatpush.bf16.msra.mxu0 %v355
    %367 = vmatpush.bf16.msra.mxu0 %v354
    %368 = vmatpush.bf16.msra.mxu0 %v353
    %369 = vmatpush.bf16.msra.mxu0 %v352
    %370 = vmatpush.bf16.msra.mxu0 %v351
    %371 = vmatpush.bf16.msra.mxu0 %v350
    %372 = vmatpush.bf16.msra.mxu0 %v349
    %373 = vmatmul.bf16.gmra.mxu0 %v294
    %v374 = vpop.f32.mrf.mxu0
    %v375 = vadd.f32 %v315, %v374
    %v376 = vpop.f32.mrf.mxu0
    %377 = vdwg.mxu0
    %v378 = vxor.u32 %v375, 2147483648
    %v379 = vmul.f32 %v378, 1.442695
    %v380 = vpow.pop %v379
    %v381 = vadd.f32 %v380, 1.0
    %v382 = vrcp.pop %v381
    %v383 = vmul.f32 %v381, %v382
    %v384 = vsub.f32 1.0, %v383
    %v385 = vmul.f32 %v382, %v384
    %v386 = vadd.f32 %v382, %v385
    %vm387 = vweird.f32 %v381
    %vm388 = vweird.f32 %v382
    %vm389 = vmor %vm387, %vm388
    %v390 = vsel %vm389, %v382, %v386
    %v391 = vand.u32 2147483647, %v381
    %vm392 = vcmp.eq.f32.partialorder %v391, 8.507059e+37
    %v393 = vand.u32 %v381, 2147483648
    %v394 = vor.u32 1.1754944e-38, %v393
    %v395 = vsel %vm392, %v394, %v390
    %v396 = vmul.f32 1.0, %v395
    %v397 = vmul.f32 %v375, %v396
    %v398 = vpack.c.bf16 %v397, %v397
    %s399 = scalar_lea.vmem [#allocation2], 192
    %v400 = vld [vmem:[%s399] sm:$0xf]
    %v401 = vld [vmem:[%s399 + $0x4] sm:$0xf]
    %v402 = vld [vmem:[%s399 + $0x8] sm:$0xf]
    %v403 = vld [vmem:[%s399 + $0xc] sm:$0xf]
    %v404 = vld [vmem:[%s399 + $0x10] sm:$0xf]
    %v405 = vld [vmem:[%s399 + $0x14] sm:$0xf]
    %v406 = vld [vmem:[%s399 + $0x18] sm:$0xf]
    %v407 = vld [vmem:[%s399 + $0x1c] sm:$0xf]
    %v408 = vld [vmem:[%s399 + $0x20] sm:$0xf]
    %v409 = vld [vmem:[%s399 + $0x24] sm:$0xf]
    %v410 = vld [vmem:[%s399 + $0x28] sm:$0xf]
    %v411 = vld [vmem:[%s399 + $0x2c] sm:$0xf]
    %v412 = vld [vmem:[%s399 + $0x30] sm:$0xf]
    %v413 = vld [vmem:[%s399 + $0x34] sm:$0xf]
    %v414 = vld [vmem:[%s399 + $0x38] sm:$0xf]
    %v415 = vld [vmem:[%s399 + $0x3c] sm:$0xf]
    %s416 = scalar_lea.vmem %s7, 3
    %v417 = vld [vmem:[%s416] sm:$0x1]
    %v419 = vperm.slane %v417, 0
    %v437 = vunpack.c.l.b16 %v400
    %v438 = vunpack.c.l.b16 %v401
    %v439 = vunpack.c.l.b16 %v402
    %v440 = vunpack.c.l.b16 %v403
    %v441 = vunpack.c.l.b16 %v404
    %v442 = vunpack.c.l.b16 %v405
    %v443 = vunpack.c.l.b16 %v406
    %v444 = vunpack.c.l.b16 %v407
    %v445 = vunpack.c.l.b16 %v408
    %v446 = vunpack.c.l.b16 %v409
    %v447 = vunpack.c.l.b16 %v410
    %v448 = vunpack.c.l.b16 %v411
    %v449 = vunpack.c.l.b16 %v412
    %v450 = vunpack.c.l.b16 %v413
    %v451 = vunpack.c.l.b16 %v414
    %v452 = vunpack.c.l.b16 %v415
    %v453 = vpack.c.b16 %v438, %v437
    %v454 = vpack.c.b16 %v440, %v439
    %v455 = vpack.c.b16 %v442, %v441
    %v456 = vpack.c.b16 %v444, %v443
    %v457 = vpack.c.b16 %v446, %v445
    %v458 = vpack.c.b16 %v448, %v447
    %v459 = vpack.c.b16 %v450, %v449
    %v460 = vpack.c.b16 %v452, %v451
    %469 = vmatpush.bf16.msra.mxu0 %v460
    %470 = vmatpush.bf16.msra.mxu0 %v459
    %471 = vmatpush.bf16.msra.mxu0 %v458
    %472 = vmatpush.bf16.msra.mxu0 %v457
    %473 = vmatpush.bf16.msra.mxu0 %v456
    %474 = vmatpush.bf16.msra.mxu0 %v455
    %475 = vmatpush.bf16.msra.mxu0 %v454
    %476 = vmatpush.bf16.msra.mxu0 %v453
    %477 = vmatmul.bf16.gmra.mxu0 %v398
    %v478 = vpop.f32.mrf.mxu0
    %v479 = vadd.f32 %v419, %v478
    %v480 = vpop.f32.mrf.mxu0
    %481 = vdwg.mxu0
    %v482 = vxor.u32 %v479, 2147483648
    %v483 = vmul.f32 %v482, 1.442695
    %v484 = vpow.pop %v483
    %v485 = vadd.f32 %v484, 1.0
    %v486 = vrcp.pop %v485
    %v487 = vmul.f32 %v485, %v486
    %v488 = vsub.f32 1.0, %v487
    %v489 = vmul.f32 %v486, %v488
    %v490 = vadd.f32 %v486, %v489
    %vm491 = vweird.f32 %v485
    %vm492 = vweird.f32 %v486
    %vm493 = vmor %vm491, %vm492
    %v494 = vsel %vm493, %v486, %v490
    %v495 = vand.u32 2147483647, %v485
    %vm496 = vcmp.eq.f32.partialorder %v495, 8.507059e+37
    %v497 = vand.u32 %v485, 2147483648
    %v498 = vor.u32 1.1754944e-38, %v497
    %v499 = vsel %vm496, %v498, %v494
    %v500 = vmul.f32 1.0, %v499
    %v501 = vmul.f32 %v479, %v500
    %v502 = vadd.f32 %v189, %v501
    %v503 = vmul.f32 %v502, 0.70710677
    %v504 = vpack.c.bf16 %v503, %v503
    %s505 = scalar_lea.vmem [#allocation2], 256
    %v506 = vld [vmem:[%s505] sm:$0xf]
    %v507 = vld [vmem:[%s505 + $0x4] sm:$0xf]
    %v508 = vld [vmem:[%s505 + $0x8] sm:$0xf]
    %v509 = vld [vmem:[%s505 + $0xc] sm:$0xf]
    %v510 = vld [vmem:[%s505 + $0x10] sm:$0xf]
    %v511 = vld [vmem:[%s505 + $0x14] sm:$0xf]
    %v512 = vld [vmem:[%s505 + $0x18] sm:$0xf]
    %v513 = vld [vmem:[%s505 + $0x1c] sm:$0xf]
    %v514 = vld [vmem:[%s505 + $0x20] sm:$0xf]
    %v515 = vld [vmem:[%s505 + $0x24] sm:$0xf]
    %v516 = vld [vmem:[%s505 + $0x28] sm:$0xf]
    %v517 = vld [vmem:[%s505 + $0x2c] sm:$0xf]
    %v518 = vld [vmem:[%s505 + $0x30] sm:$0xf]
    %v519 = vld [vmem:[%s505 + $0x34] sm:$0xf]
    %v520 = vld [vmem:[%s505 + $0x38] sm:$0xf]
    %v521 = vld [vmem:[%s505 + $0x3c] sm:$0xf]
    %s522 = scalar_lea.vmem %s7, 4
    %v523 = vld [vmem:[%s522] sm:$0x1]
    %v525 = vperm.slane %v523, 0
    %v543 = vunpack.c.l.b16 %v506
    %v544 = vunpack.c.l.b16 %v507
    %v545 = vunpack.c.l.b16 %v508
    %v546 = vunpack.c.l.b16 %v509
    %v547 = vunpack.c.l.b16 %v510
    %v548 = vunpack.c.l.b16 %v511
    %v549 = vunpack.c.l.b16 %v512
    %v550 = vunpack.c.l.b16 %v513
    %v551 = vunpack.c.l.b16 %v514
    %v552 = vunpack.c.l.b16 %v515
    %v553 = vunpack.c.l.b16 %v516
    %v554 = vunpack.c.l.b16 %v517
    %v555 = vunpack.c.l.b16 %v518
    %v556 = vunpack.c.l.b16 %v519
    %v557 = vunpack.c.l.b16 %v520
    %v558 = vunpack.c.l.b16 %v521
    %v559 = vpack.c.b16 %v544, %v543
    %v560 = vpack.c.b16 %v546, %v545
    %v561 = vpack.c.b16 %v548, %v547
    %v562 = vpack.c.b16 %v550, %v549
    %v563 = vpack.c.b16 %v552, %v551
    %v564 = vpack.c.b16 %v554, %v553
    %v565 = vpack.c.b16 %v556, %v555
    %v566 = vpack.c.b16 %v558, %v557
    %575 = vmatpush.bf16.msra.mxu0 %v566
    %576 = vmatpush.bf16.msra.mxu0 %v565
    %577 = vmatpush.bf16.msra.mxu0 %v564
    %578 = vmatpush.bf16.msra.mxu0 %v563
    %579 = vmatpush.bf16.msra.mxu0 %v562
    %580 = vmatpush.bf16.msra.mxu0 %v561
    %581 = vmatpush.bf16.msra.mxu0 %v560
    %582 = vmatpush.bf16.msra.mxu0 %v559
    %583 = vmatmul.bf16.gmra.mxu0 %v504
    %v584 = vpop.f32.mrf.mxu0
    %v585 = vadd.f32 %v525, %v584
    %v586 = vpop.f32.mrf.mxu0
    %587 = vdwg.mxu0
    %v588 = vxor.u32 %v585, 2147483648
    %v589 = vmul.f32 %v588, 1.442695
    %v590 = vpow.pop %v589
    %v591 = vadd.f32 %v590, 1.0
    %v592 = vrcp.pop %v591
    %v593 = vmul.f32 %v591, %v592
    %v594 = vsub.f32 1.0, %v593
    %v595 = vmul.f32 %v592, %v594
    %v596 = vadd.f32 %v592, %v595
    %vm597 = vweird.f32 %v591
    %vm598 = vweird.f32 %v592
    %vm599 = vmor %vm597, %vm598
    %v600 = vsel %vm599, %v592, %v596
    %v601 = vand.u32 2147483647, %v591
    %vm602 = vcmp.eq.f32.partialorder %v601, 8.507059e+37
    %v603 = vand.u32 %v591, 2147483648
    %v604 = vor.u32 1.1754944e-38, %v603
    %v605 = vsel %vm602, %v604, %v600
    %v606 = vmul.f32 1.0, %v605
    %v607 = vmul.f32 %v585, %v606
    %v608 = vpack.c.bf16 %v607, %v607
    %s609 = scalar_lea.vmem [#allocation2], 320
    %v610 = vld [vmem:[%s609] sm:$0xf]
    %v611 = vld [vmem:[%s609 + $0x4] sm:$0xf]
    %v612 = vld [vmem:[%s609 + $0x8] sm:$0xf]
    %v613 = vld [vmem:[%s609 + $0xc] sm:$0xf]
    %v614 = vld [vmem:[%s609 + $0x10] sm:$0xf]
    %v615 = vld [vmem:[%s609 + $0x14] sm:$0xf]
    %v616 = vld [vmem:[%s609 + $0x18] sm:$0xf]
    %v617 = vld [vmem:[%s609 + $0x1c] sm:$0xf]
    %v618 = vld [vmem:[%s609 + $0x20] sm:$0xf]
    %v619 = vld [vmem:[%s609 + $0x24] sm:$0xf]
    %v620 = vld [vmem:[%s609 + $0x28] sm:$0xf]
    %v621 = vld [vmem:[%s609 + $0x2c] sm:$0xf]
    %v622 = vld [vmem:[%s609 + $0x30] sm:$0xf]
    %v623 = vld [vmem:[%s609 + $0x34] sm:$0xf]
    %v624 = vld [vmem:[%s609 + $0x38] sm:$0xf]
    %v625 = vld [vmem:[%s609 + $0x3c] sm:$0xf]
    %s626 = scalar_lea.vmem %s7, 5
    %v627 = vld [vmem:[%s626] sm:$0x1]
    %v629 = vperm.slane %v627, 0
    %v647 = vunpack.c.l.b16 %v610
    %v648 = vunpack.c.l.b16 %v611
    %v649 = vunpack.c.l.b16 %v612
    %v650 = vunpack.c.l.b16 %v613
    %v651 = vunpack.c.l.b16 %v614
    %v652 = vunpack.c.l.b16 %v615
    %v653 = vunpack.c.l.b16 %v616
    %v654 = vunpack.c.l.b16 %v617
    %v655 = vunpack.c.l.b16 %v618
    %v656 = vunpack.c.l.b16 %v619
    %v657 = vunpack.c.l.b16 %v620
    %v658 = vunpack.c.l.b16 %v621
    %v659 = vunpack.c.l.b16 %v622
    %v660 = vunpack.c.l.b16 %v623
    %v661 = vunpack.c.l.b16 %v624
    %v662 = vunpack.c.l.b16 %v625
    %v663 = vpack.c.b16 %v648, %v647
    %v664 = vpack.c.b16 %v650, %v649
    %v665 = vpack.c.b16 %v652, %v651
    %v666 = vpack.c.b16 %v654, %v653
    %v667 = vpack.c.b16 %v656, %v655
    %v668 = vpack.c.b16 %v658, %v657
    %v669 = vpack.c.b16 %v660, %v659
    %v670 = vpack.c.b16 %v662, %v661
    %679 = vmatpush.bf16.msra.mxu0 %v670
    %680 = vmatpush.bf16.msra.mxu0 %v669
    %681 = vmatpush.bf16.msra.mxu0 %v668
    %682 = vmatpush.bf16.msra.mxu0 %v667
    %683 = vmatpush.bf16.msra.mxu0 %v666
    %684 = vmatpush.bf16.msra.mxu0 %v665
    %685 = vmatpush.bf16.msra.mxu0 %v664
    %686 = vmatpush.bf16.msra.mxu0 %v663
    %687 = vmatmul.bf16.gmra.mxu0 %v608
    %v688 = vpop.f32.mrf.mxu0
    %v689 = vadd.f32 %v629, %v688
    %v690 = vpop.f32.mrf.mxu0
    %691 = vdwg.mxu0
    %v692 = vxor.u32 %v689, 2147483648
    %v693 = vmul.f32 %v692, 1.442695
    %v694 = vpow.pop %v693
    %v695 = vadd.f32 %v694, 1.0
    %v696 = vrcp.pop %v695
    %v697 = vmul.f32 %v695, %v696
    %v698 = vsub.f32 1.0, %v697
    %v699 = vmul.f32 %v696, %v698
    %v700 = vadd.f32 %v696, %v699
    %vm701 = vweird.f32 %v695
    %vm702 = vweird.f32 %v696
    %vm703 = vmor %vm701, %vm702
    %v704 = vsel %vm703, %v696, %v700
    %v705 = vand.u32 2147483647, %v695
    %vm706 = vcmp.eq.f32.partialorder %v705, 8.507059e+37
    %v707 = vand.u32 %v695, 2147483648
    %v708 = vor.u32 1.1754944e-38, %v707
    %v709 = vsel %vm706, %v708, %v704
    %v710 = vmul.f32 1.0, %v709
    %v711 = vmul.f32 %v689, %v710
    %v712 = vpack.c.bf16 %v711, %v711
    %s713 = scalar_lea.vmem [#allocation2], 384
    %v714 = vld [vmem:[%s713] sm:$0xf]
    %v715 = vld [vmem:[%s713 + $0x4] sm:$0xf]
    %v716 = vld [vmem:[%s713 + $0x8] sm:$0xf]
    %v717 = vld [vmem:[%s713 + $0xc] sm:$0xf]
    %v718 = vld [vmem:[%s713 + $0x10] sm:$0xf]
    %v719 = vld [vmem:[%s713 + $0x14] sm:$0xf]
    %v720 = vld [vmem:[%s713 + $0x18] sm:$0xf]
    %v721 = vld [vmem:[%s713 + $0x1c] sm:$0xf]
    %v722 = vld [vmem:[%s713 + $0x20] sm:$0xf]
    %v723 = vld [vmem:[%s713 + $0x24] sm:$0xf]
    %v724 = vld [vmem:[%s713 + $0x28] sm:$0xf]
    %v725 = vld [vmem:[%s713 + $0x2c] sm:$0xf]
    %v726 = vld [vmem:[%s713 + $0x30] sm:$0xf]
    %v727 = vld [vmem:[%s713 + $0x34] sm:$0xf]
    %v728 = vld [vmem:[%s713 + $0x38] sm:$0xf]
    %v729 = vld [vmem:[%s713 + $0x3c] sm:$0xf]
    %s730 = scalar_lea.vmem %s7, 6
    %v731 = vld [vmem:[%s730] sm:$0x1]
    %v733 = vperm.slane %v731, 0
    %v751 = vunpack.c.l.b16 %v714
    %v752 = vunpack.c.l.b16 %v715
    %v753 = vunpack.c.l.b16 %v716
    %v754 = vunpack.c.l.b16 %v717
    %v755 = vunpack.c.l.b16 %v718
    %v756 = vunpack.c.l.b16 %v719
    %v757 = vunpack.c.l.b16 %v720
    %v758 = vunpack.c.l.b16 %v721
    %v759 = vunpack.c.l.b16 %v722
    %v760 = vunpack.c.l.b16 %v723
    %v761 = vunpack.c.l.b16 %v724
    %v762 = vunpack.c.l.b16 %v725
    %v763 = vunpack.c.l.b16 %v726
    %v764 = vunpack.c.l.b16 %v727
    %v765 = vunpack.c.l.b16 %v728
    %v766 = vunpack.c.l.b16 %v729
    %v767 = vpack.c.b16 %v752, %v751
    %v768 = vpack.c.b16 %v754, %v753
    %v769 = vpack.c.b16 %v756, %v755
    %v770 = vpack.c.b16 %v758, %v757
    %v771 = vpack.c.b16 %v760, %v759
    %v772 = vpack.c.b16 %v762, %v761
    %v773 = vpack.c.b16 %v764, %v763
    %v774 = vpack.c.b16 %v766, %v765
    %783 = vmatpush.bf16.msra.mxu0 %v774
    %784 = vmatpush.bf16.msra.mxu0 %v773
    %785 = vmatpush.bf16.msra.mxu0 %v772
    %786 = vmatpush.bf16.msra.mxu0 %v771
    %787 = vmatpush.bf16.msra.mxu0 %v770
    %788 = vmatpush.bf16.msra.mxu0 %v769
    %789 = vmatpush.bf16.msra.mxu0 %v768
    %790 = vmatpush.bf16.msra.mxu0 %v767
    %791 = vmatmul.bf16.gmra.mxu0 %v712
    %v792 = vpop.f32.mrf.mxu0
    %v793 = vadd.f32 %v733, %v792
    %v794 = vpop.f32.mrf.mxu0
    %795 = vdwg.mxu0
    %v796 = vxor.u32 %v793, 2147483648
    %v797 = vmul.f32 %v796, 1.442695
    %v798 = vpow.pop %v797
    %v799 = vadd.f32 %v798, 1.0
    %v800 = vrcp.pop %v799
    %v801 = vmul.f32 %v799, %v800
    %v802 = vsub.f32 1.0, %v801
    %v803 = vmul.f32 %v800, %v802
    %v804 = vadd.f32 %v800, %v803
    %vm805 = vweird.f32 %v799
    %vm806 = vweird.f32 %v800
    %vm807 = vmor %vm805, %vm806
    %v808 = vsel %vm807, %v800, %v804
    %v809 = vand.u32 2147483647, %v799
    %vm810 = vcmp.eq.f32.partialorder %v809, 8.507059e+37
    %v811 = vand.u32 %v799, 2147483648
    %v812 = vor.u32 1.1754944e-38, %v811
    %v813 = vsel %vm810, %v812, %v808
    %v814 = vmul.f32 1.0, %v813
    %v815 = vmul.f32 %v793, %v814
    %v816 = vadd.f32 %v503, %v815
    %v817 = vmul.f32 %v816, 0.70710677
    %v818 = vpack.c.bf16 %v817, %v817
    %s819 = scalar_lea.vmem [#allocation2], 448
    %v820 = vld [vmem:[%s819] sm:$0xf]
    %v821 = vld [vmem:[%s819 + $0x4] sm:$0xf]
    %v822 = vld [vmem:[%s819 + $0x8] sm:$0xf]
    %v823 = vld [vmem:[%s819 + $0xc] sm:$0xf]
    %v824 = vld [vmem:[%s819 + $0x10] sm:$0xf]
    %v825 = vld [vmem:[%s819 + $0x14] sm:$0xf]
    %v826 = vld [vmem:[%s819 + $0x18] sm:$0xf]
    %v827 = vld [vmem:[%s819 + $0x1c] sm:$0xf]
    %v828 = vld [vmem:[%s819 + $0x20] sm:$0xf]
    %v829 = vld [vmem:[%s819 + $0x24] sm:$0xf]
    %v830 = vld [vmem:[%s819 + $0x28] sm:$0xf]
    %v831 = vld [vmem:[%s819 + $0x2c] sm:$0xf]
    %v832 = vld [vmem:[%s819 + $0x30] sm:$0xf]
    %v833 = vld [vmem:[%s819 + $0x34] sm:$0xf]
    %v834 = vld [vmem:[%s819 + $0x38] sm:$0xf]
    %v835 = vld [vmem:[%s819 + $0x3c] sm:$0xf]
    %s836 = scalar_lea.vmem %s7, 7
    %v837 = vld [vmem:[%s836] sm:$0x1]
    %v839 = vperm.slane %v837, 0
    %v857 = vunpack.c.l.b16 %v820
    %v858 = vunpack.c.l.b16 %v821
    %v859 = vunpack.c.l.b16 %v822
    %v860 = vunpack.c.l.b16 %v823
    %v861 = vunpack.c.l.b16 %v824
    %v862 = vunpack.c.l.b16 %v825
    %v863 = vunpack.c.l.b16 %v826
    %v864 = vunpack.c.l.b16 %v827
    %v865 = vunpack.c.l.b16 %v828
    %v866 = vunpack.c.l.b16 %v829
    %v867 = vunpack.c.l.b16 %v830
    %v868 = vunpack.c.l.b16 %v831
    %v869 = vunpack.c.l.b16 %v832
    %v870 = vunpack.c.l.b16 %v833
    %v871 = vunpack.c.l.b16 %v834
    %v872 = vunpack.c.l.b16 %v835
    %v873 = vpack.c.b16 %v858, %v857
    %v874 = vpack.c.b16 %v860, %v859
    %v875 = vpack.c.b16 %v862, %v861
    %v876 = vpack.c.b16 %v864, %v863
    %v877 = vpack.c.b16 %v866, %v865
    %v878 = vpack.c.b16 %v868, %v867
    %v879 = vpack.c.b16 %v870, %v869
    %v880 = vpack.c.b16 %v872, %v871
    %889 = vmatpush.bf16.msra.mxu0 %v880
    %890 = vmatpush.bf16.msra.mxu0 %v879
    %891 = vmatpush.bf16.msra.mxu0 %v878
    %892 = vmatpush.bf16.msra.mxu0 %v877
    %893 = vmatpush.bf16.msra.mxu0 %v876
    %894 = vmatpush.bf16.msra.mxu0 %v875
    %895 = vmatpush.bf16.msra.mxu0 %v874
    %896 = vmatpush.bf16.msra.mxu0 %v873
    %897 = vmatmul.bf16.gmra.mxu0 %v818
    %v898 = vpop.f32.mrf.mxu0
    %v899 = vadd.f32 %v839, %v898
    %v900 = vpop.f32.mrf.mxu0
    %901 = vdwg.mxu0
    %v902 = vxor.u32 %v899, 2147483648
    %v903 = vmul.f32 %v902, 1.442695
    %v904 = vpow.pop %v903
    %v905 = vadd.f32 %v904, 1.0
    %v906 = vrcp.pop %v905
    %v907 = vmul.f32 %v905, %v906
    %v908 = vsub.f32 1.0, %v907
    %v909 = vmul.f32 %v906, %v908
    %v910 = vadd.f32 %v906, %v909
    %vm911 = vweird.f32 %v905
    %vm912 = vweird.f32 %v906
    %vm913 = vmor %vm911, %vm912
    %v914 = vsel %vm913, %v906, %v910
    %v915 = vand.u32 2147483647, %v905
    %vm916 = vcmp.eq.f32.partialorder %v915, 8.507059e+37
    %v917 = vand.u32 %v905, 2147483648
    %v918 = vor.u32 1.1754944e-38, %v917
    %v919 = vsel %vm916, %v918, %v914
    %v920 = vmul.f32 1.0, %v919
    %v921 = vmul.f32 %v899, %v920
    %v922 = vpack.c.bf16 %v921, %v921
    %s923 = scalar_lea.vmem [#allocation2], 512
    %v924 = vld [vmem:[%s923] sm:$0xf]
    %v925 = vld [vmem:[%s923 + $0x4] sm:$0xf]
    %v926 = vld [vmem:[%s923 + $0x8] sm:$0xf]
    %v927 = vld [vmem:[%s923 + $0xc] sm:$0xf]
    %v928 = vld [vmem:[%s923 + $0x10] sm:$0xf]
    %v929 = vld [vmem:[%s923 + $0x14] sm:$0xf]
    %v930 = vld [vmem:[%s923 + $0x18] sm:$0xf]
    %v931 = vld [vmem:[%s923 + $0x1c] sm:$0xf]
    %v932 = vld [vmem:[%s923 + $0x20] sm:$0xf]
    %v933 = vld [vmem:[%s923 + $0x24] sm:$0xf]
    %v934 = vld [vmem:[%s923 + $0x28] sm:$0xf]
    %v935 = vld [vmem:[%s923 + $0x2c] sm:$0xf]
    %v936 = vld [vmem:[%s923 + $0x30] sm:$0xf]
    %v937 = vld [vmem:[%s923 + $0x34] sm:$0xf]
    %v938 = vld [vmem:[%s923 + $0x38] sm:$0xf]
    %v939 = vld [vmem:[%s923 + $0x3c] sm:$0xf]
    %s940 = scalar_lea.vmem %s7, 8
    %v941 = vld [vmem:[%s940] sm:$0x1]
    %v943 = vperm.slane %v941, 0
    %v961 = vunpack.c.l.b16 %v924
    %v962 = vunpack.c.l.b16 %v925
    %v963 = vunpack.c.l.b16 %v926
    %v964 = vunpack.c.l.b16 %v927
    %v965 = vunpack.c.l.b16 %v928
    %v966 = vunpack.c.l.b16 %v929
    %v967 = vunpack.c.l.b16 %v930
    %v968 = vunpack.c.l.b16 %v931
    %v969 = vunpack.c.l.b16 %v932
    %v970 = vunpack.c.l.b16 %v933
    %v971 = vunpack.c.l.b16 %v934
    %v972 = vunpack.c.l.b16 %v935
    %v973 = vunpack.c.l.b16 %v936
    %v974 = vunpack.c.l.b16 %v937
    %v975 = vunpack.c.l.b16 %v938
    %v976 = vunpack.c.l.b16 %v939
    %v977 = vpack.c.b16 %v962, %v961
    %v978 = vpack.c.b16 %v964, %v963
    %v979 = vpack.c.b16 %v966, %v965
    %v980 = vpack.c.b16 %v968, %v967
    %v981 = vpack.c.b16 %v970, %v969
    %v982 = vpack.c.b16 %v972, %v971
    %v983 = vpack.c.b16 %v974, %v973
    %v984 = vpack.c.b16 %v976, %v975
    %993 = vmatpush.bf16.msra.mxu0 %v984
    %994 = vmatpush.bf16.msra.mxu0 %v983
    %995 = vmatpush.bf16.msra.mxu0 %v982
    %996 = vmatpush.bf16.msra.mxu0 %v981
    %997 = vmatpush.bf16.msra.mxu0 %v980
    %998 = vmatpush.bf16.msra.mxu0 %v979
    %999 = vmatpush.bf16.msra.mxu0 %v978
    %1000 = vmatpush.bf16.msra.mxu0 %v977
    %1001 = vmatmul.bf16.gmra.mxu0 %v922
    %v1002 = vpop.f32.mrf.mxu0
    %v1003 = vadd.f32 %v943, %v1002
    %v1004 = vpop.f32.mrf.mxu0
    %1005 = vdwg.mxu0
    %v1006 = vxor.u32 %v1003, 2147483648
    %v1007 = vmul.f32 %v1006, 1.442695
    %v1008 = vpow.pop %v1007
    %v1009 = vadd.f32 %v1008, 1.0
    %v1010 = vrcp.pop %v1009
    %v1011 = vmul.f32 %v1009, %v1010
    %v1012 = vsub.f32 1.0, %v1011
    %v1013 = vmul.f32 %v1010, %v1012
    %v1014 = vadd.f32 %v1010, %v1013
    %vm1015 = vweird.f32 %v1009
    %vm1016 = vweird.f32 %v1010
    %vm1017 = vmor %vm1015, %vm1016
    %v1018 = vsel %vm1017, %v1010, %v1014
    %v1019 = vand.u32 2147483647, %v1009
    %vm1020 = vcmp.eq.f32.partialorder %v1019, 8.507059e+37
    %v1021 = vand.u32 %v1009, 2147483648
    %v1022 = vor.u32 1.1754944e-38, %v1021
    %v1023 = vsel %vm1020, %v1022, %v1018
    %v1024 = vmul.f32 1.0, %v1023
    %v1025 = vmul.f32 %v1003, %v1024
    %v1026 = vpack.c.bf16 %v1025, %v1025
    %s1027 = scalar_lea.vmem [#allocation2], 576
    %v1028 = vld [vmem:[%s1027] sm:$0xf]
    %v1029 = vld [vmem:[%s1027 + $0x4] sm:$0xf]
    %v1030 = vld [vmem:[%s1027 + $0x8] sm:$0xf]
    %v1031 = vld [vmem:[%s1027 + $0xc] sm:$0xf]
    %v1032 = vld [vmem:[%s1027 + $0x10] sm:$0xf]
    %v1033 = vld [vmem:[%s1027 + $0x14] sm:$0xf]
    %v1034 = vld [vmem:[%s1027 + $0x18] sm:$0xf]
    %v1035 = vld [vmem:[%s1027 + $0x1c] sm:$0xf]
    %v1036 = vld [vmem:[%s1027 + $0x20] sm:$0xf]
    %v1037 = vld [vmem:[%s1027 + $0x24] sm:$0xf]
    %v1038 = vld [vmem:[%s1027 + $0x28] sm:$0xf]
    %v1039 = vld [vmem:[%s1027 + $0x2c] sm:$0xf]
    %v1040 = vld [vmem:[%s1027 + $0x30] sm:$0xf]
    %v1041 = vld [vmem:[%s1027 + $0x34] sm:$0xf]
    %v1042 = vld [vmem:[%s1027 + $0x38] sm:$0xf]
    %v1043 = vld [vmem:[%s1027 + $0x3c] sm:$0xf]
    %s1044 = scalar_lea.vmem %s7, 9
    %v1045 = vld [vmem:[%s1044] sm:$0x1]
    %v1047 = vperm.slane %v1045, 0
    %v1065 = vunpack.c.l.b16 %v1028
    %v1066 = vunpack.c.l.b16 %v1029
    %v1067 = vunpack.c.l.b16 %v1030
    %v1068 = vunpack.c.l.b16 %v1031
    %v1069 = vunpack.c.l.b16 %v1032
    %v1070 = vunpack.c.l.b16 %v1033
    %v1071 = vunpack.c.l.b16 %v1034
    %v1072 = vunpack.c.l.b16 %v1035
    %v1073 = vunpack.c.l.b16 %v1036
    %v1074 = vunpack.c.l.b16 %v1037
    %v1075 = vunpack.c.l.b16 %v1038
    %v1076 = vunpack.c.l.b16 %v1039
    %v1077 = vunpack.c.l.b16 %v1040
    %v1078 = vunpack.c.l.b16 %v1041
    %v1079 = vunpack.c.l.b16 %v1042
    %v1080 = vunpack.c.l.b16 %v1043
    %v1081 = vpack.c.b16 %v1066, %v1065
    %v1082 = vpack.c.b16 %v1068, %v1067
    %v1083 = vpack.c.b16 %v1070, %v1069
    %v1084 = vpack.c.b16 %v1072, %v1071
    %v1085 = vpack.c.b16 %v1074, %v1073
    %v1086 = vpack.c.b16 %v1076, %v1075
    %v1087 = vpack.c.b16 %v1078, %v1077
    %v1088 = vpack.c.b16 %v1080, %v1079
    %1097 = vmatpush.bf16.msra.mxu0 %v1088
    %1098 = vmatpush.bf16.msra.mxu0 %v1087
    %1099 = vmatpush.bf16.msra.mxu0 %v1086
    %1100 = vmatpush.bf16.msra.mxu0 %v1085
    %1101 = vmatpush.bf16.msra.mxu0 %v1084
    %1102 = vmatpush.bf16.msra.mxu0 %v1083
    %1103 = vmatpush.bf16.msra.mxu0 %v1082
    %1104 = vmatpush.bf16.msra.mxu0 %v1081
    %1105 = vmatmul.bf16.gmra.mxu0 %v1026
    %v1106 = vpop.f32.mrf.mxu0
    %v1107 = vadd.f32 %v1047, %v1106
    %v1108 = vpop.f32.mrf.mxu0
    %1109 = vdwg.mxu0
    %v1110 = vxor.u32 %v1107, 2147483648
    %v1111 = vmul.f32 %v1110, 1.442695
    %v1112 = vpow.pop %v1111
    %v1113 = vadd.f32 %v1112, 1.0
    %v1114 = vrcp.pop %v1113
    %v1115 = vmul.f32 %v1113, %v1114
    %v1116 = vsub.f32 1.0, %v1115
    %v1117 = vmul.f32 %v1114, %v1116
    %v1118 = vadd.f32 %v1114, %v1117
    %vm1119 = vweird.f32 %v1113
    %vm1120 = vweird.f32 %v1114
    %vm1121 = vmor %vm1119, %vm1120
    %v1122 = vsel %vm1121, %v1114, %v1118
    %v1123 = vand.u32 2147483647, %v1113
    %vm1124 = vcmp.eq.f32.partialorder %v1123, 8.507059e+37
    %v1125 = vand.u32 %v1113, 2147483648
    %v1126 = vor.u32 1.1754944e-38, %v1125
    %v1127 = vsel %vm1124, %v1126, %v1122
    %v1128 = vmul.f32 1.0, %v1127
    %v1129 = vmul.f32 %v1107, %v1128
    %v1130 = vadd.f32 %v817, %v1129
    %v1131 = vmul.f32 %v1130, 0.70710677
    %v1132 = vadd.f32 %v1131, %v167
    %v1133 = vpack.c.bf16 %v1132, %v1132
    %s1134 = scalar_lea.vmem [#allocation2], 640
    %v1135 = vld [vmem:[%s1134] sm:$0xf]
    %v1136 = vld [vmem:[%s1134 + $0x4] sm:$0xf]
    %v1137 = vld [vmem:[%s1134 + $0x8] sm:$0xf]
    %v1138 = vld [vmem:[%s1134 + $0xc] sm:$0xf]
    %v1139 = vld [vmem:[%s1134 + $0x10] sm:$0xf]
    %v1140 = vld [vmem:[%s1134 + $0x14] sm:$0xf]
    %v1141 = vld [vmem:[%s1134 + $0x18] sm:$0xf]
    %v1142 = vld [vmem:[%s1134 + $0x1c] sm:$0xf]
    %v1143 = vld [vmem:[%s1134 + $0x20] sm:$0xf]
    %v1144 = vld [vmem:[%s1134 + $0x24] sm:$0xf]
    %v1145 = vld [vmem:[%s1134 + $0x28] sm:$0xf]
    %v1146 = vld [vmem:[%s1134 + $0x2c] sm:$0xf]
    %v1147 = vld [vmem:[%s1134 + $0x30] sm:$0xf]
    %v1148 = vld [vmem:[%s1134 + $0x34] sm:$0xf]
    %v1149 = vld [vmem:[%s1134 + $0x38] sm:$0xf]
    %v1150 = vld [vmem:[%s1134 + $0x3c] sm:$0xf]
    %s1151 = scalar_lea.vmem %s7, 10
    %v1152 = vld [vmem:[%s1151] sm:$0x1]
    %v1154 = vperm.slane %v1152, 0
    %v1172 = vunpack.c.l.b16 %v1135
    %v1173 = vunpack.c.l.b16 %v1136
    %v1174 = vunpack.c.l.b16 %v1137
    %v1175 = vunpack.c.l.b16 %v1138
    %v1176 = vunpack.c.l.b16 %v1139
    %v1177 = vunpack.c.l.b16 %v1140
    %v1178 = vunpack.c.l.b16 %v1141
    %v1179 = vunpack.c.l.b16 %v1142
    %v1180 = vunpack.c.l.b16 %v1143
    %v1181 = vunpack.c.l.b16 %v1144
    %v1182 = vunpack.c.l.b16 %v1145
    %v1183 = vunpack.c.l.b16 %v1146
    %v1184 = vunpack.c.l.b16 %v1147
    %v1185 = vunpack.c.l.b16 %v1148
    %v1186 = vunpack.c.l.b16 %v1149
    %v1187 = vunpack.c.l.b16 %v1150
    %v1188 = vpack.c.b16 %v1173, %v1172
    %v1189 = vpack.c.b16 %v1175, %v1174
    %v1190 = vpack.c.b16 %v1177, %v1176
    %v1191 = vpack.c.b16 %v1179, %v1178
    %v1192 = vpack.c.b16 %v1181, %v1180
    %v1193 = vpack.c.b16 %v1183, %v1182
    %v1194 = vpack.c.b16 %v1185, %v1184
    %v1195 = vpack.c.b16 %v1187, %v1186
    %1204 = vmatpush.bf16.msra.mxu0 %v1195
    %1205 = vmatpush.bf16.msra.mxu0 %v1194
    %1206 = vmatpush.bf16.msra.mxu0 %v1193
    %1207 = vmatpush.bf16.msra.mxu0 %v1192
    %1208 = vmatpush.bf16.msra.mxu0 %v1191
    %1209 = vmatpush.bf16.msra.mxu0 %v1190
    %1210 = vmatpush.bf16.msra.mxu0 %v1189
    %1211 = vmatpush.bf16.msra.mxu0 %v1188
    %1212 = vmatmul.bf16.gmra.mxu0 %v1133
    %v1213 = vpop.f32.mrf.mxu0
    %v1214 = vadd.f32 %v1154, %v1213
    %v1215 = vpop.f32.mrf.mxu0
    %1216 = vdwg.mxu0
    %v1217 = vxor.u32 %v1214, 2147483648
    %v1218 = vmul.f32 %v1217, 1.442695
    %v1219 = vpow.pop %v1218
    %v1220 = vadd.f32 %v1219, 1.0
    %v1221 = vrcp.pop %v1220
    %v1222 = vmul.f32 %v1220, %v1221
    %v1223 = vsub.f32 1.0, %v1222
    %v1224 = vmul.f32 %v1221, %v1223
    %v1225 = vadd.f32 %v1221, %v1224
    %vm1226 = vweird.f32 %v1220
    %vm1227 = vweird.f32 %v1221
    %vm1228 = vmor %vm1226, %vm1227
    %v1229 = vsel %vm1228, %v1221, %v1225
    %v1230 = vand.u32 2147483647, %v1220
    %vm1231 = vcmp.eq.f32.partialorder %v1230, 8.507059e+37
    %v1232 = vand.u32 %v1220, 2147483648
    %v1233 = vor.u32 1.1754944e-38, %v1232
    %v1234 = vsel %vm1231, %v1233, %v1229
    %v1235 = vmul.f32 1.0, %v1234
    %v1236 = vmul.f32 %v1214, %v1235
    %v1237 = vpack.c.bf16 %v1236, %v1236
    %s1238 = scalar_lea.vmem [#allocation2], 704
    %v1239 = vld [vmem:[%s1238] sm:$0xf]
    %v1240 = vld [vmem:[%s1238 + $0x4] sm:$0xf]
    %v1241 = vld [vmem:[%s1238 + $0x8] sm:$0xf]
    %v1242 = vld [vmem:[%s1238 + $0xc] sm:$0xf]
    %v1243 = vld [vmem:[%s1238 + $0x10] sm:$0xf]
    %v1244 = vld [vmem:[%s1238 + $0x14] sm:$0xf]
    %v1245 = vld [vmem:[%s1238 + $0x18] sm:$0xf]
    %v1246 = vld [vmem:[%s1238 + $0x1c] sm:$0xf]
    %v1247 = vld [vmem:[%s1238 + $0x20] sm:$0xf]
    %v1248 = vld [vmem:[%s1238 + $0x24] sm:$0xf]
    %v1249 = vld [vmem:[%s1238 + $0x28] sm:$0xf]
    %v1250 = vld [vmem:[%s1238 + $0x2c] sm:$0xf]
    %v1251 = vld [vmem:[%s1238 + $0x30] sm:$0xf]
    %v1252 = vld [vmem:[%s1238 + $0x34] sm:$0xf]
    %v1253 = vld [vmem:[%s1238 + $0x38] sm:$0xf]
    %v1254 = vld [vmem:[%s1238 + $0x3c] sm:$0xf]
    %s1255 = scalar_lea.vmem %s7, 11
    %v1256 = vld [vmem:[%s1255] sm:$0x1]
    %v1258 = vperm.slane %v1256, 0
    %v1276 = vunpack.c.l.b16 %v1239
    %v1277 = vunpack.c.l.b16 %v1240
    %v1278 = vunpack.c.l.b16 %v1241
    %v1279 = vunpack.c.l.b16 %v1242
    %v1280 = vunpack.c.l.b16 %v1243
    %v1281 = vunpack.c.l.b16 %v1244
    %v1282 = vunpack.c.l.b16 %v1245
    %v1283 = vunpack.c.l.b16 %v1246
    %v1284 = vunpack.c.l.b16 %v1247
    %v1285 = vunpack.c.l.b16 %v1248
    %v1286 = vunpack.c.l.b16 %v1249
    %v1287 = vunpack.c.l.b16 %v1250
    %v1288 = vunpack.c.l.b16 %v1251
    %v1289 = vunpack.c.l.b16 %v1252
    %v1290 = vunpack.c.l.b16 %v1253
    %v1291 = vunpack.c.l.b16 %v1254
    %v1292 = vpack.c.b16 %v1277, %v1276
    %v1293 = vpack.c.b16 %v1279, %v1278
    %v1294 = vpack.c.b16 %v1281, %v1280
    %v1295 = vpack.c.b16 %v1283, %v1282
    %v1296 = vpack.c.b16 %v1285, %v1284
    %v1297 = vpack.c.b16 %v1287, %v1286
    %v1298 = vpack.c.b16 %v1289, %v1288
    %v1299 = vpack.c.b16 %v1291, %v1290
    %1308 = vmatpush.bf16.msra.mxu0 %v1299
    %1309 = vmatpush.bf16.msra.mxu0 %v1298
    %1310 = vmatpush.bf16.msra.mxu0 %v1297
    %1311 = vmatpush.bf16.msra.mxu0 %v1296
    %1312 = vmatpush.bf16.msra.mxu0 %v1295
    %1313 = vmatpush.bf16.msra.mxu0 %v1294
    %1314 = vmatpush.bf16.msra.mxu0 %v1293
    %1315 = vmatpush.bf16.msra.mxu0 %v1292
    %1316 = vmatmul.bf16.gmra.mxu0 %v1237
    %v1317 = vpop.f32.mrf.mxu0
    %v1318 = vadd.f32 %v1258, %v1317
    %v1319 = vpop.f32.mrf.mxu0
    %1320 = vdwg.mxu0
    %1321 = vst [vmem:[#allocation5] sm:$0xff] %v1318
    // Predicated region
    $region38: #{tpu_custom_call.1} parent=1 // pred_check
      _
    $region39: #{tpu_custom_call.1} parent=1 // pred_check_branch
      %1323 = sbr.rel (0) target = $region41
    $region40: #{tpu_custom_call.1} parent=1 // pred_region
      %1325 = vsyncadd [#allocation4], 0
      %s1327 = sshll.u32 [#allocation5], 4
      %s1328 = int_to_ptr.vmem [resolvable:$true] %s1327
      %s1329 = sshll.u32 %s8, 4
      %s1330 = int_to_ptr.hbm [resolvable:$true] %s1329
      %1332 = dma.vmem_to_hbm [thread:$0]  %s1328, 128, %s1330, [#allocation4]
    $region41: #{tpu_custom_call.1} parent=1 // pred_fallthru
      _
    // Predicated region
    $region42: #{tpu_custom_call.1} parent=1 // pred_check
      _
    $region43: #{tpu_custom_call.1} parent=1 // pred_check_branch
      %1334 = sbr.rel (0) target = $region45
    $region44: #{tpu_custom_call.1} parent=1 // pred_region
      %1336 = dma.done [#allocation4], 128
    $region45: #{tpu_custom_call.1} parent=1 // pred_fallthru
      _
    %1337 = vsyncpa [#allocation3], 1
    %1338 = vsyncpa [#allocation4], 1

</llo_original>
